<compile_context>
chip_gen: v6e
topology: v6e:2x2x1
jax: 0.10.0
libtpu: 0.0.40
codegen_flags: <defaults>
</compile_context>

<pallas_src>
import jax
import jax.numpy as jnp
from jax.experimental import pallas as pl
from jax.experimental.pallas import tpu as pltpu


# ----------------------------------------------------------------------------
# Fused kernel.  One grid step = one block of NB images (ROWS_B = NB*Ho*Wo
# patch rows):
#   stem im2col matmul (BN scale pre-folded) + bias + SiLU
#   -> head 1x1-conv matmul (BN scale pre-folded) + bias + SiLU
#   -> global average pool as an MXU matmul with a constant mean matrix
#   -> Linear(Ch -> 1) as VPU multiply + lane reduce (bias from SMEM), Sigmoid.
# ----------------------------------------------------------------------------
def fused_cnn_kernel(patches_ref, w_stem_ref, b_stem_ref,
                     w_head_ref, b_head_ref,
                     pool_ref, w_cls_ref, b_cls_ref, o_ref):
    # patches_ref: (ROWS_B, KP)     bf16  im2col patches (K padded 27 -> 32)
    # w_stem_ref:  (KP, Cs)         bf16  stem conv weight * BN scale
    # b_stem_ref:  (1, Cs)          f32   folded BN bias
    # w_head_ref:  (Cs, Ch)         bf16  head 1x1 conv weight * BN scale
    # b_head_ref:  (1, Ch)          f32   folded BN bias
    # pool_ref:    (NB, ROWS_B)     bf16  constant per-block mean matrix
    # w_cls_ref:   (1, Ch)          f32   classifier Linear weight (row vector)
    # b_cls_ref:   (1, 1)           f32   classifier Linear bias (SMEM scalar)
    # o_ref:       (NB, 1)          f32

    # --- Stem: 3x3/s2 conv as one MXU matmul (bf16 operands, f32 accum) ------
    h = jnp.dot(patches_ref[...], w_stem_ref[...],
                preferred_element_type=jnp.float32)          # (ROWS_B, Cs)
    h = h + b_stem_ref[...]                                  # BN bias only
    h = h * jax.nn.sigmoid(h)                                # SiLU

    # --- Head: 1x1 conv (matmul) + folded BN bias + SiLU ---------------------
    g = jnp.dot(h.astype(jnp.bfloat16), w_head_ref[...],
                preferred_element_type=jnp.float32)          # (ROWS_B, Ch)
    g = g + b_head_ref[...]
    g = g * jax.nn.sigmoid(g)                                # SiLU

    # --- Global average pool on the MXU (no reshape / XLU sublane reduce) ----
    pooled = jnp.dot(pool_ref[...], g.astype(jnp.bfloat16),
                     preferred_element_type=jnp.float32)     # (NB, Ch)

    # nn.Dropout(0.5) is identity at inference -> no-op.
    # --- Linear(Ch -> 1): VPU multiply + lane reduce, bias from SMEM ----------
    logits = jnp.sum(pooled * w_cls_ref[...], axis=-1,
                     keepdims=True) + b_cls_ref[0, 0]        # (NB, 1)
    o_ref[...] = jax.nn.sigmoid(logits)                      # final nn.Sigmoid


# ----------------------------------------------------------------------------
# Model wrapper
# ----------------------------------------------------------------------------
def simple_cnn_forward(x_nchw, params, *, images_per_block=8):
    # PyTorch NCHW -> NHWC (glue, outside the kernel).
    x = jnp.transpose(x_nchw, (0, 2, 3, 1)).astype(jnp.float32)
    N, H, W, Cin = x.shape
    Ho = (H + 2 - 3) // 2 + 1
    Wo = (W + 2 - 3) // 2 + 1
    P = Ho * Wo
    NB = min(images_per_block, N)
    assert N % NB == 0, "batch must be divisible by images_per_block"
    assert NB % 8 == 0 or NB == N, "image block must be sublane-aligned"

    # pad=1 halo + im2col in the wrapper -> (N*P, 9*Cin) lane-dense patch
    # matrix, one row per output pixel, image-major row order.
    # TODO(synk): at real EfficientNet-B3 resolutions, build the taps in-kernel
    #             (DMA the padded NHWC tile + pl.ds strided slices) to avoid
    #             this extra HBM round trip of the inflated patch matrix.
    xp = jnp.pad(x, ((0, 0), (1, 1), (1, 1), (0, 0)))
    taps = [xp[:, kh:kh + 2 * (Ho - 1) + 1:2, kw:kw + 2 * (Wo - 1) + 1:2, :]
            for kh in range(3) for kw in range(3)]           # 9 x (N, Ho, Wo, Cin)
    patches = jnp.stack(taps, axis=3).reshape(N * P, 9 * Cin)

    # Contraction dim K = 9*Cin = 27 -> zero-pad to 32 (bf16 sublane-aligned).
    K = 9 * Cin
    KP = 32 if K <= 32 else ((K + 15) // 16) * 16
    patches = jnp.pad(patches, ((0, 0), (0, KP - K))).astype(jnp.bfloat16)

    # Fold BN scales into weights IN F32, then cast to bf16 MXU operands.
    Cs = params["w_stem"].shape[-1]
    Ch = params["w_head"].shape[-1]
    w_stem = (params["w_stem"].reshape(K, Cs).astype(jnp.float32)
              * params["s_stem"])
    w_stem = jnp.pad(w_stem, ((0, KP - K), (0, 0))).astype(jnp.bfloat16)  # (KP, Cs)
    w_head = (params["w_head"].astype(jnp.float32)
              * params["s_head"]).astype(jnp.bfloat16)                     # (Cs, Ch)
    w_cls = params["w_cls"].reshape(1, Ch).astype(jnp.float32)             # (1, Ch)
    b_cls = params["b_cls"].reshape(1, 1).astype(jnp.float32)              # SMEM

    # Constant per-block mean matrix for the MXU global-average pool.
    ROWS_B = NB * P
    row_img = jnp.arange(ROWS_B) // P
    pool = (row_img[None, :] == jnp.arange(NB)[:, None]).astype(jnp.float32)
    pool = (pool / P).astype(jnp.bfloat16)                                 # (NB, ROWS_B)

    rows = N * P
    # Advisory cost estimate for XLA's scheduler.
    flops = (2 * rows * KP * Cs                       # stem matmul
             + 2 * rows * Cs * Ch                     # head matmul
             + 2 * (N // NB) * NB * ROWS_B * Ch       # pool matmul
             + rows * (3 * Cs + 3 * Ch)               # bias + SiLU epilogues
             + N * (2 * Ch + 2))                      # classifier tail
    transcendentals = rows * (Cs + Ch) + N            # sigmoids (SiLU + final)
    bytes_accessed = (patches.size * 2 + w_stem.size * 2 + w_head.size * 2
                      + pool.size * 2 + (Cs + 2 * Ch + 1) * 4 + N * 4)

    vmem_full = pl.BlockSpec(memory_space=pltpu.MemorySpace.VMEM)

    return pl.pallas_call(
        fused_cnn_kernel,
        out_shape=jax.ShapeDtypeStruct((N, 1), jnp.float32),
        grid=(N // NB,),
        in_specs=[
            pl.BlockSpec((ROWS_B, KP), lambda i: (i, 0)),        # patch row block
            vmem_full,                                           # w_stem
            vmem_full,                                           # b_stem
            vmem_full,                                           # w_head
            vmem_full,                                           # b_head
            vmem_full,                                           # pool matrix
            vmem_full,                                           # w_cls
            pl.BlockSpec(memory_space=pltpu.MemorySpace.SMEM),   # b_cls scalar
        ],
        out_specs=pl.BlockSpec((NB, 1), lambda i: (i, 0)),
        compiler_params=pltpu.CompilerParams(
            dimension_semantics=("parallel",)),
        cost_estimate=pl.CostEstimate(flops=flops,
                                      transcendentals=transcendentals,
                                      bytes_accessed=bytes_accessed),
    )(patches, w_stem, params["b_stem"], w_head, params["b_head"],
      pool, w_cls, b_cls)


# ----------------------------------------------------------------------------
# Pure-JAX reference (same math, f32 throughout, UNfolded BN) for correctness.
# ----------------------------------------------------------------------------
def reference_forward(x_nchw, params):
    x = jnp.transpose(x_nchw, (0, 2, 3, 1)).astype(jnp.float32)
    N, H, W, Cin = x.shape
    Ho = (H + 2 - 3) // 2 + 1
    Wo = (W + 2 - 3) // 2 + 1
    xp = jnp.pad(x, ((0, 0), (1, 1), (1, 1), (0, 0)))
    taps = [xp[:, kh:kh + 2 * (Ho - 1) + 1:2, kw:kw + 2 * (Wo - 1) + 1:2, :]
            for kh in range(3) for kw in range(3)]
    patches = jnp.stack(taps, axis=3).reshape(N * Ho * Wo, 9 * Cin)
    h = patches @ params["w_stem"].reshape(9 * Cin, -1)
    h = h * params["s_stem"] + params["b_stem"]
    h = h * jax.nn.sigmoid(h)
    g = h @ params["w_head"]
    g = g * params["s_head"] + params["b_head"]
    g = g * jax.nn.sigmoid(g)
    pooled = jnp.mean(g.reshape(N, Ho * Wo, -1), axis=1)
    logits = pooled @ params["w_cls"] + params["b_cls"]
    return jax.nn.sigmoid(logits)


def init_params(key, cin=3, c_stem=32, c_head=64):
    ks = jax.random.split(key, 8)
    return {
        "w_stem": 0.1 * jax.random.normal(ks[0], (3, 3, cin, c_stem), jnp.float32),
        "s_stem": 0.5 + jax.random.uniform(ks[1], (1, c_stem), jnp.float32),
        "b_stem": 0.1 * jax.random.normal(ks[2], (1, c_stem), jnp.float32),
        "w_head": 0.1 * jax.random.normal(ks[3], (c_stem, c_head), jnp.float32),
        "s_head": 0.5 + jax.random.uniform(ks[4], (1, c_head), jnp.float32),
        "b_head": 0.1 * jax.random.normal(ks[5], (1, c_head), jnp.float32),
        "w_cls": 0.1 * jax.random.normal(ks[6], (c_head, 1), jnp.float32),
        "b_cls": 0.1 * jax.random.normal(ks[7], (1, 1), jnp.float32),
    }


if __name__ == "__main__":
    key = jax.random.PRNGKey(0)
    k_x, k_p = jax.random.split(key)
    # Small NCHW image batch; batch 16 so each of the 2 grid blocks carries
    # 512 patch rows (fills the MXU M dim) and the grid is >1 (v7x megacore).
    x = jax.random.normal(k_x, (16, 3, 16, 16), jnp.float32)
    params = init_params(k_p)

    out = simple_cnn_forward(x, params, images_per_block=8)
    out = jax.block_until_ready(out)

    ref = reference_forward(x, params)
    assert out.shape == (16, 1)
    assert bool(jnp.all((out >= 0.0) & (out <= 1.0)))
    assert bool(jnp.allclose(out, ref, atol=5e-2)), (out, ref)
    print("KERNEL_OK")
</pallas_src>

<mosaic_0001>
module attributes {stable_mosaic.version = 11 : i64} {
  func.func @fused_cnn_kernel(%arg0: i32, %arg1: memref<512x32xbf16, #tpu.memory_space<vmem>>, %arg2: memref<32x32xbf16, #tpu.memory_space<vmem>>, %arg3: memref<1x32xf32, #tpu.memory_space<vmem>>, %arg4: memref<32x64xbf16, #tpu.memory_space<vmem>>, %arg5: memref<1x64xf32, #tpu.memory_space<vmem>>, %arg6: memref<8x512xbf16, #tpu.memory_space<vmem>>, %arg7: memref<1x64xf32, #tpu.memory_space<vmem>>, %arg8: memref<1x1xf32, #tpu.memory_space<smem>>, %arg9: memref<8x1xf32, #tpu.memory_space<vmem>>) attributes {dimension_semantics = [#tpu.dimension_semantics<parallel>], iteration_bounds = array<i64: 2>, scalar_prefetch = 0 : i64, scratch_operands = 0 : i64, tpu.core_type = #tpu.core_type<tc>, window_params = [{transform_indices = @transform_0, window_bounds = array<i64: 512, 32>}, {pipeline_mode = #tpu.pipeline_mode<synchronous>, transform_indices = @transform_1, window_bounds = array<i64: 32, 32>}, {pipeline_mode = #tpu.pipeline_mode<synchronous>, transform_indices = @transform_2, window_bounds = array<i64: 1, 32>}, {pipeline_mode = #tpu.pipeline_mode<synchronous>, transform_indices = @transform_3, window_bounds = array<i64: 32, 64>}, {pipeline_mode = #tpu.pipeline_mode<synchronous>, transform_indices = @transform_4, window_bounds = array<i64: 1, 64>}, {pipeline_mode = #tpu.pipeline_mode<synchronous>, transform_indices = @transform_5, window_bounds = array<i64: 8, 512>}, {pipeline_mode = #tpu.pipeline_mode<synchronous>, transform_indices = @transform_6, window_bounds = array<i64: 1, 64>}, {transform_indices = @transform_7, window_bounds = array<i64: 1, 1>}, {transform_indices = @transform_8, window_bounds = array<i64: 8, 1>}]} {
    %c0 = arith.constant 0 : index
    %c0_0 = arith.constant 0 : index
    %0 = vector.load %arg1[%c0, %c0_0] : memref<512x32xbf16, #tpu.memory_space<vmem>>, vector<512x32xbf16>
    %c0_1 = arith.constant 0 : index
    %c0_2 = arith.constant 0 : index
    %1 = vector.load %arg2[%c0_1, %c0_2] : memref<32x32xbf16, #tpu.memory_space<vmem>>, vector<32x32xbf16>
    %cst = arith.constant dense<0.000000e+00> : vector<512x32xf32>
    %2 = tpu.matmul %0, %1, %cst {dimension_numbers = #tpu.dot_dimension_numbers<[1], [0], [0], [1], [0, 0, 1, 1], [], []>} : vector<512x32xbf16>, vector<32x32xbf16>, vector<512x32xf32> -> vector<512x32xf32>
    %c0_3 = arith.constant 0 : index
    %c0_4 = arith.constant 0 : index
    %3 = vector.load %arg3[%c0_3, %c0_4] : memref<1x32xf32, #tpu.memory_space<vmem>>, vector<1x32xf32>
    %4 = vector.broadcast %3 : vector<1x32xf32> to vector<512x32xf32>
    %5 = arith.addf %2, %4 : vector<512x32xf32>
    %6 = arith.negf %5 : vector<512x32xf32>
    %7 = math.exp %6 : vector<512x32xf32>
    %cst_5 = arith.constant 1.000000e+00 : f32
    %8 = vector.broadcast %cst_5 : f32 to vector<512x32xf32>
    %9 = arith.addf %8, %7 : vector<512x32xf32>
    %10 = arith.divf %8, %9 : vector<512x32xf32>
    %11 = arith.mulf %5, %10 : vector<512x32xf32>
    %12 = arith.truncf %11 : vector<512x32xf32> to vector<512x32xbf16>
    %c0_6 = arith.constant 0 : index
    %c0_7 = arith.constant 0 : index
    %13 = vector.load %arg4[%c0_6, %c0_7] : memref<32x64xbf16, #tpu.memory_space<vmem>>, vector<32x64xbf16>
    %cst_8 = arith.constant dense<0.000000e+00> : vector<512x64xf32>
    %14 = tpu.matmul %12, %13, %cst_8 {dimension_numbers = #tpu.dot_dimension_numbers<[1], [0], [0], [1], [0, 0, 1, 1], [], []>} : vector<512x32xbf16>, vector<32x64xbf16>, vector<512x64xf32> -> vector<512x64xf32>
    %c0_9 = arith.constant 0 : index
    %c0_10 = arith.constant 0 : index
    %15 = vector.load %arg5[%c0_9, %c0_10] : memref<1x64xf32, #tpu.memory_space<vmem>>, vector<1x64xf32>
    %16 = vector.broadcast %15 : vector<1x64xf32> to vector<512x64xf32>
    %17 = arith.addf %14, %16 : vector<512x64xf32>
    %18 = arith.negf %17 : vector<512x64xf32>
    %19 = math.exp %18 : vector<512x64xf32>
    %cst_11 = arith.constant 1.000000e+00 : f32
    %20 = vector.broadcast %cst_11 : f32 to vector<512x64xf32>
    %21 = arith.addf %20, %19 : vector<512x64xf32>
    %22 = arith.divf %20, %21 : vector<512x64xf32>
    %23 = arith.mulf %17, %22 : vector<512x64xf32>
    %c0_12 = arith.constant 0 : index
    %c0_13 = arith.constant 0 : index
    %24 = vector.load %arg6[%c0_12, %c0_13] : memref<8x512xbf16, #tpu.memory_space<vmem>>, vector<8x512xbf16>
    %25 = arith.truncf %23 : vector<512x64xf32> to vector<512x64xbf16>
    %cst_14 = arith.constant dense<0.000000e+00> : vector<8x64xf32>
    %26 = tpu.matmul %24, %25, %cst_14 {dimension_numbers = #tpu.dot_dimension_numbers<[1], [0], [0], [1], [0, 0, 1, 1], [], []>} : vector<8x512xbf16>, vector<512x64xbf16>, vector<8x64xf32> -> vector<8x64xf32>
    %c0_15 = arith.constant 0 : index
    %c0_16 = arith.constant 0 : index
    %27 = vector.load %arg7[%c0_15, %c0_16] : memref<1x64xf32, #tpu.memory_space<vmem>>, vector<1x64xf32>
    %28 = vector.broadcast %27 : vector<1x64xf32> to vector<8x64xf32>
    %29 = arith.mulf %26, %28 : vector<8x64xf32>
    %cst_17 = arith.constant dense<0.000000e+00> : vector<8xf32>
    %30 = vector.multi_reduction <add>, %29, %cst_17 [1] : vector<8x64xf32> to vector<8xf32>
    %31 = vector.shape_cast %30 : vector<8xf32> to vector<8x1xf32>
    %c0_18 = arith.constant 0 : index
    %c0_19 = arith.constant 0 : index
    %32 = memref.load %arg8[%c0_18, %c0_19] : memref<1x1xf32, #tpu.memory_space<smem>>
    %33 = vector.broadcast %32 : f32 to vector<8x1xf32>
    %34 = arith.addf %31, %33 : vector<8x1xf32>
    %35 = arith.negf %34 : vector<8x1xf32>
    %36 = math.exp %35 : vector<8x1xf32>
    %cst_20 = arith.constant 1.000000e+00 : f32
    %37 = vector.broadcast %cst_20 : f32 to vector<8x1xf32>
    %38 = arith.addf %37, %36 : vector<8x1xf32>
    %39 = arith.divf %37, %38 : vector<8x1xf32>
    %c0_21 = arith.constant 0 : index
    %c0_22 = arith.constant 0 : index
    %40 = vector.load %arg9[%c0_21, %c0_22] : memref<8x1xf32, #tpu.memory_space<vmem>>, vector<8x1xf32>
    tpu.vector_store %arg9[%c0_21, %c0_22], %39 {strides = array<i32>} : memref<8x1xf32, #tpu.memory_space<vmem>>, vector<8x1xf32>,
    return
  }
  func.func @transform_0(%arg0: i32) -> (i32, i32) {
    %c0_i32 = arith.constant 0 : i32
    %c0_i32_0 = arith.constant 0 : i32
    return %arg0, %c0_i32 : i32, i32
  }
  func.func @transform_1(%arg0: i32) -> (i32, i32) {
    %c0_i32 = arith.constant 0 : i32
    %c0_i32_0 = arith.constant 0 : i32
    %c0_i32_1 = arith.constant 0 : i32
    return %c0_i32, %c0_i32_0 : i32, i32
  }
  func.func @transform_2(%arg0: i32) -> (i32, i32) {
    %c0_i32 = arith.constant 0 : i32
    %c0_i32_0 = arith.constant 0 : i32
    %c0_i32_1 = arith.constant 0 : i32
    return %c0_i32, %c0_i32_0 : i32, i32
  }
  func.func @transform_3(%arg0: i32) -> (i32, i32) {
    %c0_i32 = arith.constant 0 : i32
    %c0_i32_0 = arith.constant 0 : i32
    %c0_i32_1 = arith.constant 0 : i32
    return %c0_i32, %c0_i32_0 : i32, i32
  }
  func.func @transform_4(%arg0: i32) -> (i32, i32) {
    %c0_i32 = arith.constant 0 : i32
    %c0_i32_0 = arith.constant 0 : i32
    %c0_i32_1 = arith.constant 0 : i32
    return %c0_i32, %c0_i32_0 : i32, i32
  }
  func.func @transform_5(%arg0: i32) -> (i32, i32) {
    %c0_i32 = arith.constant 0 : i32
    %c0_i32_0 = arith.constant 0 : i32
    %c0_i32_1 = arith.constant 0 : i32
    return %c0_i32, %c0_i32_0 : i32, i32
  }
  func.func @transform_6(%arg0: i32) -> (i32, i32) {
    %c0_i32 = arith.constant 0 : i32
    %c0_i32_0 = arith.constant 0 : i32
    %c0_i32_1 = arith.constant 0 : i32
    return %c0_i32, %c0_i32_0 : i32, i32
  }
  func.func @transform_7(%arg0: i32) -> (i32, i32) {
    %c0_i32 = arith.constant 0 : i32
    %c0_i32_0 = arith.constant 0 : i32
    %c0_i32_1 = arith.constant 0 : i32
    return %c0_i32, %c0_i32_0 : i32, i32
  }
  func.func @transform_8(%arg0: i32) -> (i32, i32) {
    %c0_i32 = arith.constant 0 : i32
    %c0_i32_0 = arith.constant 0 : i32
    return %arg0, %c0_i32 : i32, i32
  }
}

</mosaic_0001>

<llo_original>
// kernel: tpu_custom_call.1
$region0: #{tpu_custom_call.1}
  #allocation0 [shape = 'u32[]', space=smem, size = 0x4, offset = 0x4, fixed_abs, tag = 'smem constant byte address 0x4 - core index']
  #allocation1 [shape = 'u32[144,128]{1,0:T(1,128)}', space=vmem, size = 0x12000, scoped, tag = 'internal scratch']
  #allocation2 [shape = 'f32[1,1]{1,0:T(1,128)S(6)}', space=smem, size = 0x200, scoped, tag = 'scoped memory for tpu_custom_call.1']
  %s0 = inlined_call_operand.vmem [shape: bf16[1024,32], index: 0, kind: input, shape index: {}]
  %s1 = inlined_call_operand.vmem [shape: bf16[32,32], index: 1, kind: input, shape index: {}]
  %s2 = inlined_call_operand.vmem [shape: f32[1,32], index: 2, kind: input, shape index: {}]
  %s3 = inlined_call_operand.vmem [shape: bf16[32,64], index: 3, kind: input, shape index: {}]
  %s4 = inlined_call_operand.vmem [shape: f32[1,64], index: 4, kind: input, shape index: {}]
  %s5 = inlined_call_operand.vmem [shape: bf16[8,512], index: 5, kind: input, shape index: {}]
  %s6 = inlined_call_operand.vmem [shape: f32[1,64], index: 6, kind: input, shape index: {}]
  %s7 = inlined_call_operand.<no memory space> [shape: f32[1,1], index: 7, kind: input, shape index: {}]
  %s8 = inlined_call_operand.vmem [shape: f32[16,1], index: 8, kind: output, shape index: {}]
  %s9 = sld [smem:[#allocation0]]
  $region65: #{tpu_custom_call.1} parent=0
    _
  %s11 = ssub.s32 1, %s9
  %s12 = scalar_select 0, %s11, %s9
  %13 = sst [smem:[#allocation2]] %s7
  loop: start=0, step=1, limit=4
  $region2: #{tpu_custom_call.1} parent=0 // loop_pre_header
    _
  $region3: #{tpu_custom_call.1} parent=0 // loop_header
    %s15 = sphi 0, %s19
    %p16 = scmp.ge.s32.totalorder %s15, 4
    %s25 = sphi 0, %s27
    %s28 = sphi 0, %s25
    %s29 = sphi 0, %s28
    %s45 = sphi 0, %s29
    %s49 = sphi 0, %s49
    %s51 = sphi 0, %s49
    %s52 = sphi 0, %s51
    %s66 = sphi 0, %s52
    %s70 = sphi 0, %s70
    %s72 = sphi 0, %s70
    %s73 = sphi 0, %s72
    %s87 = sphi 0, %s73
    %s91 = sphi 0, %s91
    %s93 = sphi 0, %s91
    %s94 = sphi 0, %s93
    %s108 = sphi 0, %s94
    %s112 = sphi 0, %s112
    %s114 = sphi 0, %s112
    %s115 = sphi 0, %s114
    %s129 = sphi 0, %s115
    %s133 = sphi 0, %s133
    %s135 = sphi 0, %s133
    %s136 = sphi 0, %s135
    %s150 = sphi 0, %s136
    %s154 = sphi 0, %s154
    %s156 = sphi 0, %s154
    %s157 = sphi 0, %s156
    %s171 = sphi 0, %s157
    %s175 = sphi 0, %s175
    %s177 = sphi 0, %s175
    %s178 = sphi 0, %s177
    %s192 = sphi 0, %s178
    %s198 = sphi 0, %s200
    %s201 = sphi 0, %s198
    %s202 = sphi 0, %s201
    %s218 = sphi 0, %s202
  $region4: #{tpu_custom_call.1} parent=0 // loop_header_branch
    %18 = sbr.rel (%p16) target = $region8
  $region5: #{tpu_custom_call.1} parent=0 // loop_body
    %s20 = ssub.s32 %s15, 1
    %s21 = ssub.s32 %s15, 2
    %s22 = sadd.s32 %s15, 1
    %s23 = ssub.s32 %s15, %s22
    %p24 = scmp.eq.s32.totalorder %s23, 0
    %s26 = sadd.s32 %s25, 1
    %s27 = scalar_select %p24, %s25, %s26
    %p30 = pneg %p24
    %p31 = scmp.eq.s32.totalorder %s15, 1
    %p32 = por %p30, %p31
    %p33 = scmp.ne.s32.totalorder %s25, %s28
    %p34 = scmp.eq.s32.totalorder %s15, 0
    %p35 = por %p33, %p34
    %p36 = scmp.ne.s32.totalorder %s25, %s28
    %p37 = scmp.eq.s32.totalorder %s20, 1
    %p38 = por %p36, %p37
    %p39 = scmp.ne.s32.totalorder %s28, %s29
    %p40 = scmp.eq.s32.totalorder %s20, 0
    %p41 = por %p39, %p40
    %p42 = scmp.ne.s32.totalorder %s28, %s29
    %p43 = scmp.eq.s32.totalorder %s21, 1
    %p44 = por %p42, %p43
    %p46 = scmp.ne.s32.totalorder %s29, %s45
    %p47 = scmp.eq.s32.totalorder %s21, 0
    %p48 = por %p46, %p47
    %s50 = sadd.s32 %s49, 1
    %p53 = scmp.eq.s32.totalorder %s15, 1
    %p54 = scmp.ne.s32.totalorder %s49, %s51
    %p55 = scmp.eq.s32.totalorder %s15, 0
    %p56 = por %p54, %p55
    %p57 = scmp.ne.s32.totalorder %s49, %s51
    %p58 = scmp.eq.s32.totalorder %s20, 1
    %p59 = por %p57, %p58
    %p60 = scmp.ne.s32.totalorder %s51, %s52
    %p61 = scmp.eq.s32.totalorder %s20, 0
    %p62 = por %p60, %p61
    %p63 = scmp.ne.s32.totalorder %s51, %s52
    %p64 = scmp.eq.s32.totalorder %s21, 1
    %p65 = por %p63, %p64
    %p67 = scmp.ne.s32.totalorder %s52, %s66
    %p68 = scmp.eq.s32.totalorder %s21, 0
    %p69 = por %p67, %p68
    %s71 = sadd.s32 %s70, 1
    %p74 = scmp.eq.s32.totalorder %s15, 1
    %p75 = scmp.ne.s32.totalorder %s70, %s72
    %p76 = scmp.eq.s32.totalorder %s15, 0
    %p77 = por %p75, %p76
    %p78 = scmp.ne.s32.totalorder %s70, %s72
    %p79 = scmp.eq.s32.totalorder %s20, 1
    %p80 = por %p78, %p79
    %p81 = scmp.ne.s32.totalorder %s72, %s73
    %p82 = scmp.eq.s32.totalorder %s20, 0
    %p83 = por %p81, %p82
    %p84 = scmp.ne.s32.totalorder %s72, %s73
    %p85 = scmp.eq.s32.totalorder %s21, 1
    %p86 = por %p84, %p85
    %p88 = scmp.ne.s32.totalorder %s73, %s87
    %p89 = scmp.eq.s32.totalorder %s21, 0
    %p90 = por %p88, %p89
    %s92 = sadd.s32 %s91, 1
    %p95 = scmp.eq.s32.totalorder %s15, 1
    %p96 = scmp.ne.s32.totalorder %s91, %s93
    %p97 = scmp.eq.s32.totalorder %s15, 0
    %p98 = por %p96, %p97
    %p99 = scmp.ne.s32.totalorder %s91, %s93
    %p100 = scmp.eq.s32.totalorder %s20, 1
    %p101 = por %p99, %p100
    %p102 = scmp.ne.s32.totalorder %s93, %s94
    %p103 = scmp.eq.s32.totalorder %s20, 0
    %p104 = por %p102, %p103
    %p105 = scmp.ne.s32.totalorder %s93, %s94
    %p106 = scmp.eq.s32.totalorder %s21, 1
    %p107 = por %p105, %p106
    %p109 = scmp.ne.s32.totalorder %s94, %s108
    %p110 = scmp.eq.s32.totalorder %s21, 0
    %p111 = por %p109, %p110
    %s113 = sadd.s32 %s112, 1
    %p116 = scmp.eq.s32.totalorder %s15, 1
    %p117 = scmp.ne.s32.totalorder %s112, %s114
    %p118 = scmp.eq.s32.totalorder %s15, 0
    %p119 = por %p117, %p118
    %p120 = scmp.ne.s32.totalorder %s112, %s114
    %p121 = scmp.eq.s32.totalorder %s20, 1
    %p122 = por %p120, %p121
    %p123 = scmp.ne.s32.totalorder %s114, %s115
    %p124 = scmp.eq.s32.totalorder %s20, 0
    %p125 = por %p123, %p124
    %p126 = scmp.ne.s32.totalorder %s114, %s115
    %p127 = scmp.eq.s32.totalorder %s21, 1
    %p128 = por %p126, %p127
    %p130 = scmp.ne.s32.totalorder %s115, %s129
    %p131 = scmp.eq.s32.totalorder %s21, 0
    %p132 = por %p130, %p131
    %s134 = sadd.s32 %s133, 1
    %p137 = scmp.eq.s32.totalorder %s15, 1
    %p138 = scmp.ne.s32.totalorder %s133, %s135
    %p139 = scmp.eq.s32.totalorder %s15, 0
    %p140 = por %p138, %p139
    %p141 = scmp.ne.s32.totalorder %s133, %s135
    %p142 = scmp.eq.s32.totalorder %s20, 1
    %p143 = por %p141, %p142
    %p144 = scmp.ne.s32.totalorder %s135, %s136
    %p145 = scmp.eq.s32.totalorder %s20, 0
    %p146 = por %p144, %p145
    %p147 = scmp.ne.s32.totalorder %s135, %s136
    %p148 = scmp.eq.s32.totalorder %s21, 1
    %p149 = por %p147, %p148
    %p151 = scmp.ne.s32.totalorder %s136, %s150
    %p152 = scmp.eq.s32.totalorder %s21, 0
    %p153 = por %p151, %p152
    %s155 = sadd.s32 %s154, 1
    %p158 = scmp.eq.s32.totalorder %s15, 1
    %p159 = scmp.ne.s32.totalorder %s154, %s156
    %p160 = scmp.eq.s32.totalorder %s15, 0
    %p161 = por %p159, %p160
    %p162 = scmp.ne.s32.totalorder %s154, %s156
    %p163 = scmp.eq.s32.totalorder %s20, 1
    %p164 = por %p162, %p163
    %p165 = scmp.ne.s32.totalorder %s156, %s157
    %p166 = scmp.eq.s32.totalorder %s20, 0
    %p167 = por %p165, %p166
    %p168 = scmp.ne.s32.totalorder %s156, %s157
    %p169 = scmp.eq.s32.totalorder %s21, 1
    %p170 = por %p168, %p169
    %p172 = scmp.ne.s32.totalorder %s157, %s171
    %p173 = scmp.eq.s32.totalorder %s21, 0
    %p174 = por %p172, %p173
    %s176 = sadd.s32 %s175, 1
    %p179 = scmp.eq.s32.totalorder %s15, 1
    %p180 = scmp.ne.s32.totalorder %s175, %s177
    %p181 = scmp.eq.s32.totalorder %s15, 0
    %p182 = por %p180, %p181
    %p183 = scmp.ne.s32.totalorder %s175, %s177
    %p184 = scmp.eq.s32.totalorder %s20, 1
    %p185 = por %p183, %p184
    %p186 = scmp.ne.s32.totalorder %s177, %s178
    %p187 = scmp.eq.s32.totalorder %s20, 0
    %p188 = por %p186, %p187
    %p189 = scmp.ne.s32.totalorder %s177, %s178
    %p190 = scmp.eq.s32.totalorder %s21, 1
    %p191 = por %p189, %p190
    %p193 = scmp.ne.s32.totalorder %s178, %s192
    %p194 = scmp.eq.s32.totalorder %s21, 0
    %p195 = por %p193, %p194
    %s196 = ssub.s32 %s15, %s22
    %p197 = scmp.eq.s32.totalorder %s196, 0
    %s199 = sadd.s32 %s198, 1
    %s200 = scalar_select %p197, %s198, %s199
    %p203 = pneg %p197
    %p204 = scmp.eq.s32.totalorder %s15, 1
    %p205 = por %p203, %p204
    %p206 = scmp.ne.s32.totalorder %s198, %s201
    %p207 = scmp.eq.s32.totalorder %s15, 0
    %p208 = por %p206, %p207
    %p209 = scmp.ne.s32.totalorder %s198, %s201
    %p210 = scmp.eq.s32.totalorder %s20, 1
    %p211 = por %p209, %p210
    %p212 = scmp.ne.s32.totalorder %s201, %s202
    %p213 = scmp.eq.s32.totalorder %s20, 0
    %p214 = por %p212, %p213
    %p215 = scmp.ne.s32.totalorder %s201, %s202
    %p216 = scmp.eq.s32.totalorder %s21, 1
    %p217 = por %p215, %p216
    %p219 = scmp.ne.s32.totalorder %s202, %s218
    %p220 = scmp.eq.s32.totalorder %s21, 0
    %p221 = por %p219, %p220
    %p222 = scmp.le.s32.totalorder 1, %s15
    %p223 = scmp.lt.s32.totalorder %s15, 3
    %p224 = pnand %p222, %p223
    %p225 = pneg %p224
    // Predicated region
    $region9: #{tpu_custom_call.1} parent=5 // pred_check
      _
    $region10: #{tpu_custom_call.1} parent=5 // pred_check_branch
      %227 = sbr.rel (%p224) target = $region12
    $region11: #{tpu_custom_call.1} parent=5 // pred_region
      %s228 = ssub.s32 %s15, 1
      // Predicated region
      $region13: #{tpu_custom_call.1} parent=11 // pred_check
        %p229 = pneg %p62
      $region14: #{tpu_custom_call.1} parent=11 // pred_check_branch
        %231 = sbr.rel (%p229) target = $region16
      $region15: #{tpu_custom_call.1} parent=11 // pred_region
        _
      $region16: #{tpu_custom_call.1} parent=11 // pred_fallthru
        _
      // Predicated region
      $region17: #{tpu_custom_call.1} parent=11 // pred_check
        %p232 = pneg %p83
      $region18: #{tpu_custom_call.1} parent=11 // pred_check_branch
        %234 = sbr.rel (%p232) target = $region20
      $region19: #{tpu_custom_call.1} parent=11 // pred_region
        _
      $region20: #{tpu_custom_call.1} parent=11 // pred_fallthru
        _
      // Predicated region
      $region21: #{tpu_custom_call.1} parent=11 // pred_check
        %p235 = pneg %p104
      $region22: #{tpu_custom_call.1} parent=11 // pred_check_branch
        %237 = sbr.rel (%p235) target = $region24
      $region23: #{tpu_custom_call.1} parent=11 // pred_region
        _
      $region24: #{tpu_custom_call.1} parent=11 // pred_fallthru
        _
      // Predicated region
      $region25: #{tpu_custom_call.1} parent=11 // pred_check
        %p238 = pneg %p125
      $region26: #{tpu_custom_call.1} parent=11 // pred_check_branch
        %240 = sbr.rel (%p238) target = $region28
      $region27: #{tpu_custom_call.1} parent=11 // pred_region
        _
      $region28: #{tpu_custom_call.1} parent=11 // pred_fallthru
        _
      // Predicated region
      $region29: #{tpu_custom_call.1} parent=11 // pred_check
        %p241 = pneg %p146
      $region30: #{tpu_custom_call.1} parent=11 // pred_check_branch
        %243 = sbr.rel (%p241) target = $region32
      $region31: #{tpu_custom_call.1} parent=11 // pred_region
        _
      $region32: #{tpu_custom_call.1} parent=11 // pred_fallthru
        _
      // Predicated region
      $region33: #{tpu_custom_call.1} parent=11 // pred_check
        %p244 = pneg %p167
      $region34: #{tpu_custom_call.1} parent=11 // pred_check_branch
        %246 = sbr.rel (%p244) target = $region36
      $region35: #{tpu_custom_call.1} parent=11 // pred_region
        _
      $region36: #{tpu_custom_call.1} parent=11 // pred_fallthru
        _
      // Predicated region
      $region37: #{tpu_custom_call.1} parent=11 // pred_check
        %p247 = pneg %p188
      $region38: #{tpu_custom_call.1} parent=11 // pred_check_branch
        %249 = sbr.rel (%p247) target = $region40
      $region39: #{tpu_custom_call.1} parent=11 // pred_region
        _
      $region40: #{tpu_custom_call.1} parent=11 // pred_fallthru
        _
    $region12: #{tpu_custom_call.1} parent=5 // pred_fallthru
      _
    %p250 = scmp.lt.s32.totalorder %s15, 2
    // Predicated region
    $region41: #{tpu_custom_call.1} parent=5 // pred_check
      %p251 = pneg %p250
    $region42: #{tpu_custom_call.1} parent=5 // pred_check_branch
      %253 = sbr.rel (%p251) target = $region44
    $region43: #{tpu_custom_call.1} parent=5 // pred_region
      // Predicated region
      $region45: #{tpu_custom_call.1} parent=43 // pred_check
        %p254 = pneg %p35
      $region46: #{tpu_custom_call.1} parent=43 // pred_check_branch
        %256 = sbr.rel (%p254) target = $region48
      $region47: #{tpu_custom_call.1} parent=43 // pred_region
        %s257 = smul.u32 64, %s15
        %p258 = scmp.lt.s32.totalorder %s257, 127
        %s259 = scalar_select %p258, %s257, 127
        %s260 = smul.addr %s259, 4
        %s261 = scalar_lea.vmem %s0, %s260
        %s262 = smul.u32 64, %s15
      $region48: #{tpu_custom_call.1} parent=43 // pred_fallthru
        _
    $region44: #{tpu_custom_call.1} parent=5 // pred_fallthru
      _
    %p263 = scmp.le.s32.totalorder 1, %s15
    %p264 = scmp.lt.s32.totalorder %s15, 3
    %p265 = pnand %p263, %p264
    %p266 = pneg %p265
    // Predicated region
    $region49: #{tpu_custom_call.1} parent=5 // pred_check
      _
    $region50: #{tpu_custom_call.1} parent=5 // pred_check_branch
      %268 = sbr.rel (%p265) target = $region52
    $region51: #{tpu_custom_call.1} parent=5 // pred_region
      %s269 = ssub.s32 %s15, 1
      %s270 = smul.u32 64, %s20
      %p271 = scmp.lt.s32.totalorder %s270, 127
      %s272 = scalar_select %p271, %s270, 127
      %s273 = smul.addr %s272, 4
      %s274 = scalar_lea.vmem %s0, %s273
      %p275 = pneg %p41
      %p276 = pneg %p38
      %p277 = pneg %p62
      %p278 = pneg %p59
      %p279 = pneg %p83
      %p280 = pneg %p80
      %p281 = pneg %p104
      %p282 = pneg %p101
      %p283 = pneg %p125
      %p284 = pneg %p122
      %p285 = pneg %p146
      %p286 = pneg %p143
      %p287 = pneg %p167
      %p288 = pneg %p164
      %p289 = pneg %p188
      %p290 = pneg %p185
      %p291 = pneg %p214
      %p292 = pneg %p211
      %p293 = scmp.lt.s32.totalorder %s20, 1
      %s294 = scalar_select %p293, %s20, 1
      %s295 = smul.addr %s294, 8
      %s296 = scalar_lea.vmem %s8, %s295
      %s297 = smul.u32 64, %s20
      %p298 = scmp.lt.s32.totalorder %s297, 127
      %s299 = scalar_select %p298, %s297, 127
      %s300 = smul.addr %s299, 4
      %s301 = scalar_lea.vmem %s0, %s300
      %s302 = smul.u32 64, %s20
      %p303 = scmp.lt.s32.totalorder %s20, 1
      %s304 = scalar_select %p303, %s20, 1
      %s305 = smul.addr %s304, 8
      %s306 = scalar_lea.vmem %s8, %s305
      %v308 = vld [vmem:[%s301] sm:$0xf]
      %v309 = vld [vmem:[%s301 + $0x4] sm:$0xf]
      %v310 = vld [vmem:[%s301 + $0x8] sm:$0xf]
      %v311 = vld [vmem:[%s301 + $0xc] sm:$0xf]
      %v312 = vld [vmem:[%s301 + $0x10] sm:$0xf]
      %v313 = vld [vmem:[%s301 + $0x14] sm:$0xf]
      %v314 = vld [vmem:[%s301 + $0x18] sm:$0xf]
      %v315 = vld [vmem:[%s301 + $0x1c] sm:$0xf]
      %v316 = vld [vmem:[%s301 + $0x20] sm:$0xf]
      %v317 = vld [vmem:[%s301 + $0x24] sm:$0xf]
      %v318 = vld [vmem:[%s301 + $0x28] sm:$0xf]
      %v319 = vld [vmem:[%s301 + $0x2c] sm:$0xf]
      %v320 = vld [vmem:[%s301 + $0x30] sm:$0xf]
      %v321 = vld [vmem:[%s301 + $0x34] sm:$0xf]
      %v322 = vld [vmem:[%s301 + $0x38] sm:$0xf]
      %v323 = vld [vmem:[%s301 + $0x3c] sm:$0xf]
      %v324 = vld [vmem:[%s301 + $0x40] sm:$0xf]
      %v325 = vld [vmem:[%s301 + $0x44] sm:$0xf]
      %v326 = vld [vmem:[%s301 + $0x48] sm:$0xf]
      %v327 = vld [vmem:[%s301 + $0x4c] sm:$0xf]
      %v328 = vld [vmem:[%s301 + $0x50] sm:$0xf]
      %v329 = vld [vmem:[%s301 + $0x54] sm:$0xf]
      %v330 = vld [vmem:[%s301 + $0x58] sm:$0xf]
      %v331 = vld [vmem:[%s301 + $0x5c] sm:$0xf]
      %v332 = vld [vmem:[%s301 + $0x60] sm:$0xf]
      %v333 = vld [vmem:[%s301 + $0x64] sm:$0xf]
      %v334 = vld [vmem:[%s301 + $0x68] sm:$0xf]
      %v335 = vld [vmem:[%s301 + $0x6c] sm:$0xf]
      %v336 = vld [vmem:[%s301 + $0x70] sm:$0xf]
      %v337 = vld [vmem:[%s301 + $0x74] sm:$0xf]
      %v338 = vld [vmem:[%s301 + $0x78] sm:$0xf]
      %v339 = vld [vmem:[%s301 + $0x7c] sm:$0xf]
      %v340 = vld [vmem:[%s301 + $0x80] sm:$0xf]
      %v341 = vld [vmem:[%s301 + $0x84] sm:$0xf]
      %v342 = vld [vmem:[%s301 + $0x88] sm:$0xf]
      %v343 = vld [vmem:[%s301 + $0x8c] sm:$0xf]
      %v344 = vld [vmem:[%s301 + $0x90] sm:$0xf]
      %v345 = vld [vmem:[%s301 + $0x94] sm:$0xf]
      %v346 = vld [vmem:[%s301 + $0x98] sm:$0xf]
      %v347 = vld [vmem:[%s301 + $0x9c] sm:$0xf]
      %v348 = vld [vmem:[%s301 + $0xa0] sm:$0xf]
      %v349 = vld [vmem:[%s301 + $0xa4] sm:$0xf]
      %v350 = vld [vmem:[%s301 + $0xa8] sm:$0xf]
      %v351 = vld [vmem:[%s301 + $0xac] sm:$0xf]
      %v352 = vld [vmem:[%s301 + $0xb0] sm:$0xf]
      %v353 = vld [vmem:[%s301 + $0xb4] sm:$0xf]
      %v354 = vld [vmem:[%s301 + $0xb8] sm:$0xf]
      %v355 = vld [vmem:[%s301 + $0xbc] sm:$0xf]
      %v356 = vld [vmem:[%s301 + $0xc0] sm:$0xf]
      %v357 = vld [vmem:[%s301 + $0xc4] sm:$0xf]
      %v358 = vld [vmem:[%s301 + $0xc8] sm:$0xf]
      %v359 = vld [vmem:[%s301 + $0xcc] sm:$0xf]
      %v360 = vld [vmem:[%s301 + $0xd0] sm:$0xf]
      %v361 = vld [vmem:[%s301 + $0xd4] sm:$0xf]
      %v362 = vld [vmem:[%s301 + $0xd8] sm:$0xf]
      %v363 = vld [vmem:[%s301 + $0xdc] sm:$0xf]
      %v364 = vld [vmem:[%s301 + $0xe0] sm:$0xf]
      %v365 = vld [vmem:[%s301 + $0xe4] sm:$0xf]
      %v366 = vld [vmem:[%s301 + $0xe8] sm:$0xf]
      %v367 = vld [vmem:[%s301 + $0xec] sm:$0xf]
      %v368 = vld [vmem:[%s301 + $0xf0] sm:$0xf]
      %v369 = vld [vmem:[%s301 + $0xf4] sm:$0xf]
      %v370 = vld [vmem:[%s301 + $0xf8] sm:$0xf]
      %v371 = vld [vmem:[%s301 + $0xfc] sm:$0xf]
      %v372 = vld [vmem:[%s1] sm:$0xf]
      %v373 = vld [vmem:[%s1 + $0x4] sm:$0xf]
      %v374 = vld [vmem:[%s1 + $0x8] sm:$0xf]
      %v375 = vld [vmem:[%s1 + $0xc] sm:$0xf]
      %v376 = vld [vmem:[%s2] sm:$0x1]
      %v378 = vlaneseq
      %v379 = vshrl.u32 %v378, 7
      %v380 = vsub.s32 0, %v379
      %v381 = vrot.slane %v376, %v380
      %v447 = vunpack.c.l.b16 %v308
      %v448 = vunpack.c.l.b16 %v309
      %v449 = vunpack.c.l.b16 %v310
      %v450 = vunpack.c.l.b16 %v311
      %v451 = vunpack.c.l.b16 %v312
      %v452 = vunpack.c.l.b16 %v313
      %v453 = vunpack.c.l.b16 %v314
      %v454 = vunpack.c.l.b16 %v315
      %v455 = vunpack.c.l.b16 %v316
      %v456 = vunpack.c.l.b16 %v317
      %v457 = vunpack.c.l.b16 %v318
      %v458 = vunpack.c.l.b16 %v319
      %v459 = vunpack.c.l.b16 %v320
      %v460 = vunpack.c.l.b16 %v321
      %v461 = vunpack.c.l.b16 %v322
      %v462 = vunpack.c.l.b16 %v323
      %v463 = vunpack.c.l.b16 %v324
      %v464 = vunpack.c.l.b16 %v325
      %v465 = vunpack.c.l.b16 %v326
      %v466 = vunpack.c.l.b16 %v327
      %v467 = vunpack.c.l.b16 %v328
      %v468 = vunpack.c.l.b16 %v329
      %v469 = vunpack.c.l.b16 %v330
      %v470 = vunpack.c.l.b16 %v331
      %v471 = vunpack.c.l.b16 %v332
      %v472 = vunpack.c.l.b16 %v333
      %v473 = vunpack.c.l.b16 %v334
      %v474 = vunpack.c.l.b16 %v335
      %v475 = vunpack.c.l.b16 %v336
      %v476 = vunpack.c.l.b16 %v337
      %v477 = vunpack.c.l.b16 %v338
      %v478 = vunpack.c.l.b16 %v339
      %v479 = vunpack.c.l.b16 %v340
      %v480 = vunpack.c.l.b16 %v341
      %v481 = vunpack.c.l.b16 %v342
      %v482 = vunpack.c.l.b16 %v343
      %v483 = vunpack.c.l.b16 %v344
      %v484 = vunpack.c.l.b16 %v345
      %v485 = vunpack.c.l.b16 %v346
      %v486 = vunpack.c.l.b16 %v347
      %v487 = vunpack.c.l.b16 %v348
      %v488 = vunpack.c.l.b16 %v349
      %v489 = vunpack.c.l.b16 %v350
      %v490 = vunpack.c.l.b16 %v351
      %v491 = vunpack.c.l.b16 %v352
      %v492 = vunpack.c.l.b16 %v353
      %v493 = vunpack.c.l.b16 %v354
      %v494 = vunpack.c.l.b16 %v355
      %v495 = vunpack.c.l.b16 %v356
      %v496 = vunpack.c.l.b16 %v357
      %v497 = vunpack.c.l.b16 %v358
      %v498 = vunpack.c.l.b16 %v359
      %v499 = vunpack.c.l.b16 %v360
      %v500 = vunpack.c.l.b16 %v361
      %v501 = vunpack.c.l.b16 %v362
      %v502 = vunpack.c.l.b16 %v363
      %v503 = vunpack.c.l.b16 %v364
      %v504 = vunpack.c.l.b16 %v365
      %v505 = vunpack.c.l.b16 %v366
      %v506 = vunpack.c.l.b16 %v367
      %v507 = vunpack.c.l.b16 %v368
      %v508 = vunpack.c.l.b16 %v369
      %v509 = vunpack.c.l.b16 %v370
      %v510 = vunpack.c.l.b16 %v371
      %v511 = vpack.c.b16 %v448, %v447
      %v512 = vpack.c.b16 %v450, %v449
      %v513 = vpack.c.b16 %v452, %v451
      %v514 = vpack.c.b16 %v454, %v453
      %v515 = vpack.c.b16 %v456, %v455
      %v516 = vpack.c.b16 %v458, %v457
      %v517 = vpack.c.b16 %v460, %v459
      %v518 = vpack.c.b16 %v462, %v461
      %v519 = vpack.c.b16 %v464, %v463
      %v520 = vpack.c.b16 %v466, %v465
      %v521 = vpack.c.b16 %v468, %v467
      %v522 = vpack.c.b16 %v470, %v469
      %v523 = vpack.c.b16 %v472, %v471
      %v524 = vpack.c.b16 %v474, %v473
      %v525 = vpack.c.b16 %v476, %v475
      %v526 = vpack.c.b16 %v478, %v477
      %v527 = vpack.c.b16 %v480, %v479
      %v528 = vpack.c.b16 %v482, %v481
      %v529 = vpack.c.b16 %v484, %v483
      %v530 = vpack.c.b16 %v486, %v485
      %v531 = vpack.c.b16 %v488, %v487
      %v532 = vpack.c.b16 %v490, %v489
      %v533 = vpack.c.b16 %v492, %v491
      %v534 = vpack.c.b16 %v494, %v493
      %v535 = vpack.c.b16 %v496, %v495
      %v536 = vpack.c.b16 %v498, %v497
      %v537 = vpack.c.b16 %v500, %v499
      %v538 = vpack.c.b16 %v502, %v501
      %v539 = vpack.c.b16 %v504, %v503
      %v540 = vpack.c.b16 %v506, %v505
      %v541 = vpack.c.b16 %v508, %v507
      %v542 = vpack.c.b16 %v510, %v509
      %v547 = vunpack.c.l.b16 %v372
      %v548 = vunpack.c.l.b16 %v373
      %v549 = vunpack.c.l.b16 %v374
      %v550 = vunpack.c.l.b16 %v375
      %v551 = vpack.c.b16 %v548, %v547
      %v552 = vpack.c.b16 %v550, %v549
      %vm555 = vcmask 261120
      %v557 = vsel %vm555, %v511, 0
      %v560 = vsel %vm555, %v512, 0
      %v563 = vsel %vm555, %v513, 0
      %v566 = vsel %vm555, %v514, 0
      %v569 = vsel %vm555, %v515, 0
      %v572 = vsel %vm555, %v516, 0
      %v575 = vsel %vm555, %v517, 0
      %v578 = vsel %vm555, %v518, 0
      %v581 = vsel %vm555, %v519, 0
      %v584 = vsel %vm555, %v520, 0
      %v587 = vsel %vm555, %v521, 0
      %v590 = vsel %vm555, %v522, 0
      %v593 = vsel %vm555, %v523, 0
      %v596 = vsel %vm555, %v524, 0
      %v599 = vsel %vm555, %v525, 0
      %v602 = vsel %vm555, %v526, 0
      %v605 = vsel %vm555, %v527, 0
      %v608 = vsel %vm555, %v528, 0
      %v611 = vsel %vm555, %v529, 0
      %v614 = vsel %vm555, %v530, 0
      %v617 = vsel %vm555, %v531, 0
      %v620 = vsel %vm555, %v532, 0
      %v623 = vsel %vm555, %v533, 0
      %v626 = vsel %vm555, %v534, 0
      %v629 = vsel %vm555, %v535, 0
      %v632 = vsel %vm555, %v536, 0
      %v635 = vsel %vm555, %v537, 0
      %v638 = vsel %vm555, %v538, 0
      %v641 = vsel %vm555, %v539, 0
      %v644 = vsel %vm555, %v540, 0
      %v647 = vsel %vm555, %v541, 0
      %v650 = vsel %vm555, %v542, 0
      %652 = vmatprep.subr.bf16.mxu0 0
      %653 = vmatpush1.bf16.msra.mxu0 0
      %654 = vmatprep.subr.bf16.mxu0 0
      %655 = vmatpush1.bf16.msra.mxu0 0
      %656 = vmatprep.subr.bf16.mxu0 0
      %657 = vmatpush1.bf16.msra.mxu0 0
      %658 = vmatprep.subr.bf16.mxu0 0
      %659 = vmatpush1.bf16.msra.mxu0 0
      %660 = vmatprep.subr.bf16.mxu0 0
      %661 = vmatpush1.bf16.msra.mxu0 0
      %662 = vmatprep.subr.bf16.mxu0 0
      %663 = vmatpush1.bf16.msra.mxu0 0
      %664 = vmatprep.subr.bf16.mxu0 0
      %665 = vmatpush1.bf16.msra.mxu0 %v552
      %666 = vmatprep.subr.bf16.mxu0 0
      %667 = vmatpush1.bf16.msra.mxu0 %v551
      %668 = vmatprep.subr.bf16.mxu0 0
      %669 = vmatpush2.bf16.msra.mxu0 0
      %670 = vmatprep.subr.bf16.mxu0 0
      %671 = vmatpush2.bf16.msra.mxu0 0
      %672 = vmatprep.subr.bf16.mxu0 0
      %673 = vmatpush2.bf16.msra.mxu0 0
      %674 = vmatprep.subr.bf16.mxu0 0
      %675 = vmatpush2.bf16.msra.mxu0 0
      %676 = vmatprep.subr.bf16.mxu0 0
      %677 = vmatpush2.bf16.msra.mxu0 0
      %678 = vmatprep.subr.bf16.mxu0 0
      %679 = vmatpush2.bf16.msra.mxu0 0
      %680 = vmatprep.subr.bf16.mxu0 0
      %681 = vmatpush2.bf16.msra.mxu0 0
      %682 = vmatprep.subr.bf16.mxu0 0
      %683 = vmatpush2.bf16.msra.mxu0 0
      %684 = vmatprep.mubr.bf16.mxu0 0
      %685 = vmatmul.mubr.bf16.gmra.mxu0 %v557
      %v686 = vpop.f32.mrf.mxu0
      %v687 = vadd.f32 %v381, %v686
      %v688 = vpop.f32.mrf.mxu0
      %v689 = vpop.f32.mrf.mxu0
      %v690 = vadd.f32 %v381, %v689
      %v691 = vpop.f32.mrf.mxu0
      %692 = vmatprep.mubr.bf16.mxu0 0
      %693 = vmatmul.mubr.bf16.gmra.mxu0 %v560
      %v694 = vpop.f32.mrf.mxu0
      %v695 = vadd.f32 %v381, %v694
      %v696 = vpop.f32.mrf.mxu0
      %v697 = vpop.f32.mrf.mxu0
      %v698 = vadd.f32 %v381, %v697
      %v699 = vpop.f32.mrf.mxu0
      %700 = vmatprep.mubr.bf16.mxu0 0
      %701 = vmatmul.mubr.bf16.gmra.mxu0 %v563
      %v702 = vpop.f32.mrf.mxu0
      %v703 = vadd.f32 %v381, %v702
      %v704 = vpop.f32.mrf.mxu0
      %v705 = vpop.f32.mrf.mxu0
      %v706 = vadd.f32 %v381, %v705
      %v707 = vpop.f32.mrf.mxu0
      %708 = vmatprep.mubr.bf16.mxu0 0
      %709 = vmatmul.mubr.bf16.gmra.mxu0 %v566
      %v710 = vpop.f32.mrf.mxu0
      %v711 = vadd.f32 %v381, %v710
      %v712 = vpop.f32.mrf.mxu0
      %v713 = vpop.f32.mrf.mxu0
      %v714 = vadd.f32 %v381, %v713
      %v715 = vpop.f32.mrf.mxu0
      %716 = vmatprep.mubr.bf16.mxu0 0
      %717 = vmatmul.mubr.bf16.gmra.mxu0 %v569
      %v718 = vpop.f32.mrf.mxu0
      %v719 = vadd.f32 %v381, %v718
      %v720 = vpop.f32.mrf.mxu0
      %v721 = vpop.f32.mrf.mxu0
      %v722 = vadd.f32 %v381, %v721
      %v723 = vpop.f32.mrf.mxu0
      %724 = vmatprep.mubr.bf16.mxu0 0
      %725 = vmatmul.mubr.bf16.gmra.mxu0 %v572
      %v726 = vpop.f32.mrf.mxu0
      %v727 = vadd.f32 %v381, %v726
      %v728 = vpop.f32.mrf.mxu0
      %v729 = vpop.f32.mrf.mxu0
      %v730 = vadd.f32 %v381, %v729
      %v731 = vpop.f32.mrf.mxu0
      %732 = vmatprep.mubr.bf16.mxu0 0
      %733 = vmatmul.mubr.bf16.gmra.mxu0 %v575
      %v734 = vpop.f32.mrf.mxu0
      %v735 = vadd.f32 %v381, %v734
      %v736 = vpop.f32.mrf.mxu0
      %v737 = vpop.f32.mrf.mxu0
      %v738 = vadd.f32 %v381, %v737
      %v739 = vpop.f32.mrf.mxu0
      %740 = vmatprep.mubr.bf16.mxu0 0
      %741 = vmatmul.mubr.bf16.gmra.mxu0 %v578
      %v742 = vpop.f32.mrf.mxu0
      %v743 = vadd.f32 %v381, %v742
      %v744 = vpop.f32.mrf.mxu0
      %v745 = vpop.f32.mrf.mxu0
      %v746 = vadd.f32 %v381, %v745
      %v747 = vpop.f32.mrf.mxu0
      %748 = vmatprep.mubr.bf16.mxu0 0
      %749 = vmatmul.mubr.bf16.gmra.mxu0 %v581
      %v750 = vpop.f32.mrf.mxu0
      %v751 = vadd.f32 %v381, %v750
      %v752 = vpop.f32.mrf.mxu0
      %v753 = vpop.f32.mrf.mxu0
      %v754 = vadd.f32 %v381, %v753
      %v755 = vpop.f32.mrf.mxu0
      %756 = vmatprep.mubr.bf16.mxu0 0
      %757 = vmatmul.mubr.bf16.gmra.mxu0 %v584
      %v758 = vpop.f32.mrf.mxu0
      %v759 = vadd.f32 %v381, %v758
      %v760 = vpop.f32.mrf.mxu0
      %v761 = vpop.f32.mrf.mxu0
      %v762 = vadd.f32 %v381, %v761
      %v763 = vpop.f32.mrf.mxu0
      %764 = vmatprep.mubr.bf16.mxu0 0
      %765 = vmatmul.mubr.bf16.gmra.mxu0 %v587
      %v766 = vpop.f32.mrf.mxu0
      %v767 = vadd.f32 %v381, %v766
      %v768 = vpop.f32.mrf.mxu0
      %v769 = vpop.f32.mrf.mxu0
      %v770 = vadd.f32 %v381, %v769
      %v771 = vpop.f32.mrf.mxu0
      %772 = vmatprep.mubr.bf16.mxu0 0
      %773 = vmatmul.mubr.bf16.gmra.mxu0 %v590
      %v774 = vpop.f32.mrf.mxu0
      %v775 = vadd.f32 %v381, %v774
      %v776 = vpop.f32.mrf.mxu0
      %v777 = vpop.f32.mrf.mxu0
      %v778 = vadd.f32 %v381, %v777
      %v779 = vpop.f32.mrf.mxu0
      %780 = vmatprep.mubr.bf16.mxu0 0
      %781 = vmatmul.mubr.bf16.gmra.mxu0 %v593
      %v782 = vpop.f32.mrf.mxu0
      %v783 = vadd.f32 %v381, %v782
      %v784 = vpop.f32.mrf.mxu0
      %v785 = vpop.f32.mrf.mxu0
      %v786 = vadd.f32 %v381, %v785
      %v787 = vpop.f32.mrf.mxu0
      %788 = vmatprep.mubr.bf16.mxu0 0
      %789 = vmatmul.mubr.bf16.gmra.mxu0 %v596
      %v790 = vpop.f32.mrf.mxu0
      %v791 = vadd.f32 %v381, %v790
      %v792 = vpop.f32.mrf.mxu0
      %v793 = vpop.f32.mrf.mxu0
      %v794 = vadd.f32 %v381, %v793
      %v795 = vpop.f32.mrf.mxu0
      %796 = vmatprep.mubr.bf16.mxu0 0
      %797 = vmatmul.mubr.bf16.gmra.mxu0 %v599
      %v798 = vpop.f32.mrf.mxu0
      %v799 = vadd.f32 %v381, %v798
      %v800 = vpop.f32.mrf.mxu0
      %v801 = vpop.f32.mrf.mxu0
      %v802 = vadd.f32 %v381, %v801
      %v803 = vpop.f32.mrf.mxu0
      %804 = vmatprep.mubr.bf16.mxu0 0
      %805 = vmatmul.mubr.bf16.gmra.mxu0 %v602
      %v806 = vpop.f32.mrf.mxu0
      %v807 = vadd.f32 %v381, %v806
      %v808 = vpop.f32.mrf.mxu0
      %v809 = vpop.f32.mrf.mxu0
      %v810 = vadd.f32 %v381, %v809
      %v811 = vpop.f32.mrf.mxu0
      %812 = vmatprep.mubr.bf16.mxu0 0
      %813 = vmatmul.mubr.bf16.gmra.mxu0 %v605
      %v814 = vpop.f32.mrf.mxu0
      %v815 = vadd.f32 %v381, %v814
      %v816 = vpop.f32.mrf.mxu0
      %v817 = vpop.f32.mrf.mxu0
      %v818 = vadd.f32 %v381, %v817
      %v819 = vpop.f32.mrf.mxu0
      %820 = vmatprep.mubr.bf16.mxu0 0
      %821 = vmatmul.mubr.bf16.gmra.mxu0 %v608
      %v822 = vpop.f32.mrf.mxu0
      %v823 = vadd.f32 %v381, %v822
      %v824 = vpop.f32.mrf.mxu0
      %v825 = vpop.f32.mrf.mxu0
      %v826 = vadd.f32 %v381, %v825
      %v827 = vpop.f32.mrf.mxu0
      %828 = vmatprep.mubr.bf16.mxu0 0
      %829 = vmatmul.mubr.bf16.gmra.mxu0 %v611
      %v830 = vpop.f32.mrf.mxu0
      %v831 = vadd.f32 %v381, %v830
      %v832 = vpop.f32.mrf.mxu0
      %v833 = vpop.f32.mrf.mxu0
      %v834 = vadd.f32 %v381, %v833
      %v835 = vpop.f32.mrf.mxu0
      %836 = vmatprep.mubr.bf16.mxu0 0
      %837 = vmatmul.mubr.bf16.gmra.mxu0 %v614
      %v838 = vpop.f32.mrf.mxu0
      %v839 = vadd.f32 %v381, %v838
      %v840 = vpop.f32.mrf.mxu0
      %v841 = vpop.f32.mrf.mxu0
      %v842 = vadd.f32 %v381, %v841
      %v843 = vpop.f32.mrf.mxu0
      %844 = vmatprep.mubr.bf16.mxu0 0
      %845 = vmatmul.mubr.bf16.gmra.mxu0 %v617
      %v846 = vpop.f32.mrf.mxu0
      %v847 = vadd.f32 %v381, %v846
      %v848 = vpop.f32.mrf.mxu0
      %v849 = vpop.f32.mrf.mxu0
      %v850 = vadd.f32 %v381, %v849
      %v851 = vpop.f32.mrf.mxu0
      %852 = vmatprep.mubr.bf16.mxu0 0
      %853 = vmatmul.mubr.bf16.gmra.mxu0 %v620
      %v854 = vpop.f32.mrf.mxu0
      %v855 = vadd.f32 %v381, %v854
      %v856 = vpop.f32.mrf.mxu0
      %v857 = vpop.f32.mrf.mxu0
      %v858 = vadd.f32 %v381, %v857
      %v859 = vpop.f32.mrf.mxu0
      %860 = vmatprep.mubr.bf16.mxu0 0
      %861 = vmatmul.mubr.bf16.gmra.mxu0 %v623
      %v862 = vpop.f32.mrf.mxu0
      %v863 = vadd.f32 %v381, %v862
      %v864 = vpop.f32.mrf.mxu0
      %v865 = vpop.f32.mrf.mxu0
      %v866 = vadd.f32 %v381, %v865
      %v867 = vpop.f32.mrf.mxu0
      %868 = vmatprep.mubr.bf16.mxu0 0
      %869 = vmatmul.mubr.bf16.gmra.mxu0 %v626
      %v870 = vpop.f32.mrf.mxu0
      %v871 = vadd.f32 %v381, %v870
      %v872 = vpop.f32.mrf.mxu0
      %v873 = vpop.f32.mrf.mxu0
      %v874 = vadd.f32 %v381, %v873
      %v875 = vpop.f32.mrf.mxu0
      %876 = vmatprep.mubr.bf16.mxu0 0
      %877 = vmatmul.mubr.bf16.gmra.mxu0 %v629
      %v878 = vpop.f32.mrf.mxu0
      %v879 = vadd.f32 %v381, %v878
      %v880 = vpop.f32.mrf.mxu0
      %v881 = vpop.f32.mrf.mxu0
      %v882 = vadd.f32 %v381, %v881
      %v883 = vpop.f32.mrf.mxu0
      %884 = vmatprep.mubr.bf16.mxu0 0
      %885 = vmatmul.mubr.bf16.gmra.mxu0 %v632
      %v886 = vpop.f32.mrf.mxu0
      %v887 = vadd.f32 %v381, %v886
      %v888 = vpop.f32.mrf.mxu0
      %v889 = vpop.f32.mrf.mxu0
      %v890 = vadd.f32 %v381, %v889
      %v891 = vpop.f32.mrf.mxu0
      %892 = vmatprep.mubr.bf16.mxu0 0
      %893 = vmatmul.mubr.bf16.gmra.mxu0 %v635
      %v894 = vpop.f32.mrf.mxu0
      %v895 = vadd.f32 %v381, %v894
      %v896 = vpop.f32.mrf.mxu0
      %v897 = vpop.f32.mrf.mxu0
      %v898 = vadd.f32 %v381, %v897
      %v899 = vpop.f32.mrf.mxu0
      %900 = vmatprep.mubr.bf16.mxu0 0
      %901 = vmatmul.mubr.bf16.gmra.mxu0 %v638
      %v902 = vpop.f32.mrf.mxu0
      %v903 = vadd.f32 %v381, %v902
      %v904 = vpop.f32.mrf.mxu0
      %v905 = vpop.f32.mrf.mxu0
      %v906 = vadd.f32 %v381, %v905
      %v907 = vpop.f32.mrf.mxu0
      %908 = vmatprep.mubr.bf16.mxu0 0
      %909 = vmatmul.mubr.bf16.gmra.mxu0 %v641
      %v910 = vpop.f32.mrf.mxu0
      %v911 = vadd.f32 %v381, %v910
      %v912 = vpop.f32.mrf.mxu0
      %v913 = vpop.f32.mrf.mxu0
      %v914 = vadd.f32 %v381, %v913
      %v915 = vpop.f32.mrf.mxu0
      %916 = vmatprep.mubr.bf16.mxu0 0
      %917 = vmatmul.mubr.bf16.gmra.mxu0 %v644
      %v918 = vpop.f32.mrf.mxu0
      %v919 = vadd.f32 %v381, %v918
      %v920 = vpop.f32.mrf.mxu0
      %v921 = vpop.f32.mrf.mxu0
      %v922 = vadd.f32 %v381, %v921
      %v923 = vpop.f32.mrf.mxu0
      %924 = vmatprep.mubr.bf16.mxu0 0
      %925 = vmatmul.mubr.bf16.gmra.mxu0 %v647
      %v926 = vpop.f32.mrf.mxu0
      %v927 = vadd.f32 %v381, %v926
      %v928 = vpop.f32.mrf.mxu0
      %v929 = vpop.f32.mrf.mxu0
      %v930 = vadd.f32 %v381, %v929
      %v931 = vpop.f32.mrf.mxu0
      %932 = vmatprep.mubr.bf16.mxu0 0
      %933 = vmatmul.mubr.bf16.gmra.mxu0 %v650
      %v934 = vpop.f32.mrf.mxu0
      %v935 = vadd.f32 %v381, %v934
      %v936 = vpop.f32.mrf.mxu0
      %v937 = vpop.f32.mrf.mxu0
      %v938 = vadd.f32 %v381, %v937
      %v939 = vpop.f32.mrf.mxu0
      %940 = vdwg.mxu0
      %v941 = vxor.u32 %v687, 2147483648
      %v942 = vxor.u32 %v690, 2147483648
      %v943 = vxor.u32 %v695, 2147483648
      %v944 = vxor.u32 %v698, 2147483648
      %v945 = vxor.u32 %v703, 2147483648
      %v946 = vxor.u32 %v706, 2147483648
      %v947 = vxor.u32 %v711, 2147483648
      %v948 = vxor.u32 %v714, 2147483648
      %v949 = vxor.u32 %v719, 2147483648
      %v950 = vxor.u32 %v722, 2147483648
      %v951 = vxor.u32 %v727, 2147483648
      %v952 = vxor.u32 %v730, 2147483648
      %v953 = vxor.u32 %v735, 2147483648
      %v954 = vxor.u32 %v738, 2147483648
      %v955 = vxor.u32 %v743, 2147483648
      %v956 = vxor.u32 %v746, 2147483648
      %v957 = vxor.u32 %v751, 2147483648
      %v958 = vxor.u32 %v754, 2147483648
      %v959 = vxor.u32 %v759, 2147483648
      %v960 = vxor.u32 %v762, 2147483648
      %v961 = vxor.u32 %v767, 2147483648
      %v962 = vxor.u32 %v770, 2147483648
      %v963 = vxor.u32 %v775, 2147483648
      %v964 = vxor.u32 %v778, 2147483648
      %v965 = vxor.u32 %v783, 2147483648
      %v966 = vxor.u32 %v786, 2147483648
      %v967 = vxor.u32 %v791, 2147483648
      %v968 = vxor.u32 %v794, 2147483648
      %v969 = vxor.u32 %v799, 2147483648
      %v970 = vxor.u32 %v802, 2147483648
      %v971 = vxor.u32 %v807, 2147483648
      %v972 = vxor.u32 %v810, 2147483648
      %v973 = vxor.u32 %v815, 2147483648
      %v974 = vxor.u32 %v818, 2147483648
      %v975 = vxor.u32 %v823, 2147483648
      %v976 = vxor.u32 %v826, 2147483648
      %v977 = vxor.u32 %v831, 2147483648
      %v978 = vxor.u32 %v834, 2147483648
      %v979 = vxor.u32 %v839, 2147483648
      %v980 = vxor.u32 %v842, 2147483648
      %v981 = vxor.u32 %v847, 2147483648
      %v982 = vxor.u32 %v850, 2147483648
      %v983 = vxor.u32 %v855, 2147483648
      %v984 = vxor.u32 %v858, 2147483648
      %v985 = vxor.u32 %v863, 2147483648
      %v986 = vxor.u32 %v866, 2147483648
      %v987 = vxor.u32 %v871, 2147483648
      %v988 = vxor.u32 %v874, 2147483648
      %v989 = vxor.u32 %v879, 2147483648
      %v990 = vxor.u32 %v882, 2147483648
      %v991 = vxor.u32 %v887, 2147483648
      %v992 = vxor.u32 %v890, 2147483648
      %v993 = vxor.u32 %v895, 2147483648
      %v994 = vxor.u32 %v898, 2147483648
      %v995 = vxor.u32 %v903, 2147483648
      %v996 = vxor.u32 %v906, 2147483648
      %v997 = vxor.u32 %v911, 2147483648
      %v998 = vxor.u32 %v914, 2147483648
      %v999 = vxor.u32 %v919, 2147483648
      %v1000 = vxor.u32 %v922, 2147483648
      %v1001 = vxor.u32 %v927, 2147483648
      %v1002 = vxor.u32 %v930, 2147483648
      %v1003 = vxor.u32 %v935, 2147483648
      %v1004 = vxor.u32 %v938, 2147483648
      %v1005 = vmul.f32 %v941, 1.442695
      %v1006 = vpow.pop %v1005
      %v1007 = vmul.f32 %v942, 1.442695
      %v1008 = vpow.pop %v1007
      %v1009 = vmul.f32 %v943, 1.442695
      %v1010 = vpow.pop %v1009
      %v1011 = vmul.f32 %v944, 1.442695
      %v1012 = vpow.pop %v1011
      %v1013 = vmul.f32 %v945, 1.442695
      %v1014 = vpow.pop %v1013
      %v1015 = vmul.f32 %v946, 1.442695
      %v1016 = vpow.pop %v1015
      %v1017 = vmul.f32 %v947, 1.442695
      %v1018 = vpow.pop %v1017
      %v1019 = vmul.f32 %v948, 1.442695
      %v1020 = vpow.pop %v1019
      %v1021 = vmul.f32 %v949, 1.442695
      %v1022 = vpow.pop %v1021
      %v1023 = vmul.f32 %v950, 1.442695
      %v1024 = vpow.pop %v1023
      %v1025 = vmul.f32 %v951, 1.442695
      %v1026 = vpow.pop %v1025
      %v1027 = vmul.f32 %v952, 1.442695
      %v1028 = vpow.pop %v1027
      %v1029 = vmul.f32 %v953, 1.442695
      %v1030 = vpow.pop %v1029
      %v1031 = vmul.f32 %v954, 1.442695
      %v1032 = vpow.pop %v1031
      %v1033 = vmul.f32 %v955, 1.442695
      %v1034 = vpow.pop %v1033
      %v1035 = vmul.f32 %v956, 1.442695
      %v1036 = vpow.pop %v1035
      %v1037 = vmul.f32 %v957, 1.442695
      %v1038 = vpow.pop %v1037
      %v1039 = vmul.f32 %v958, 1.442695
      %v1040 = vpow.pop %v1039
      %v1041 = vmul.f32 %v959, 1.442695
      %v1042 = vpow.pop %v1041
      %v1043 = vmul.f32 %v960, 1.442695
      %v1044 = vpow.pop %v1043
      %v1045 = vmul.f32 %v961, 1.442695
      %v1046 = vpow.pop %v1045
      %v1047 = vmul.f32 %v962, 1.442695
      %v1048 = vpow.pop %v1047
      %v1049 = vmul.f32 %v963, 1.442695
      %v1050 = vpow.pop %v1049
      %v1051 = vmul.f32 %v964, 1.442695
      %v1052 = vpow.pop %v1051
      %v1053 = vmul.f32 %v965, 1.442695
      %v1054 = vpow.pop %v1053
      %v1055 = vmul.f32 %v966, 1.442695
      %v1056 = vpow.pop %v1055
      %v1057 = vmul.f32 %v967, 1.442695
      %v1058 = vpow.pop %v1057
      %v1059 = vmul.f32 %v968, 1.442695
      %v1060 = vpow.pop %v1059
      %v1061 = vmul.f32 %v969, 1.442695
      %v1062 = vpow.pop %v1061
      %v1063 = vmul.f32 %v970, 1.442695
      %v1064 = vpow.pop %v1063
      %v1065 = vmul.f32 %v971, 1.442695
      %v1066 = vpow.pop %v1065
      %v1067 = vmul.f32 %v972, 1.442695
      %v1068 = vpow.pop %v1067
      %v1069 = vmul.f32 %v973, 1.442695
      %v1070 = vpow.pop %v1069
      %v1071 = vmul.f32 %v974, 1.442695
      %v1072 = vpow.pop %v1071
      %v1073 = vmul.f32 %v975, 1.442695
      %v1074 = vpow.pop %v1073
      %v1075 = vmul.f32 %v976, 1.442695
      %v1076 = vpow.pop %v1075
      %v1077 = vmul.f32 %v977, 1.442695
      %v1078 = vpow.pop %v1077
      %v1079 = vmul.f32 %v978, 1.442695
      %v1080 = vpow.pop %v1079
      %v1081 = vmul.f32 %v979, 1.442695
      %v1082 = vpow.pop %v1081
      %v1083 = vmul.f32 %v980, 1.442695
      %v1084 = vpow.pop %v1083
      %v1085 = vmul.f32 %v981, 1.442695
      %v1086 = vpow.pop %v1085
      %v1087 = vmul.f32 %v982, 1.442695
      %v1088 = vpow.pop %v1087
      %v1089 = vmul.f32 %v983, 1.442695
      %v1090 = vpow.pop %v1089
      %v1091 = vmul.f32 %v984, 1.442695
      %v1092 = vpow.pop %v1091
      %v1093 = vmul.f32 %v985, 1.442695
      %v1094 = vpow.pop %v1093
      %v1095 = vmul.f32 %v986, 1.442695
      %v1096 = vpow.pop %v1095
      %v1097 = vmul.f32 %v987, 1.442695
      %v1098 = vpow.pop %v1097
      %v1099 = vmul.f32 %v988, 1.442695
      %v1100 = vpow.pop %v1099
      %v1101 = vmul.f32 %v989, 1.442695
      %v1102 = vpow.pop %v1101
      %v1103 = vmul.f32 %v990, 1.442695
      %v1104 = vpow.pop %v1103
      %v1105 = vmul.f32 %v991, 1.442695
      %v1106 = vpow.pop %v1105
      %v1107 = vmul.f32 %v992, 1.442695
      %v1108 = vpow.pop %v1107
      %v1109 = vmul.f32 %v993, 1.442695
      %v1110 = vpow.pop %v1109
      %v1111 = vmul.f32 %v994, 1.442695
      %v1112 = vpow.pop %v1111
      %v1113 = vmul.f32 %v995, 1.442695
      %v1114 = vpow.pop %v1113
      %v1115 = vmul.f32 %v996, 1.442695
      %v1116 = vpow.pop %v1115
      %v1117 = vmul.f32 %v997, 1.442695
      %v1118 = vpow.pop %v1117
      %v1119 = vmul.f32 %v998, 1.442695
      %v1120 = vpow.pop %v1119
      %v1121 = vmul.f32 %v999, 1.442695
      %v1122 = vpow.pop %v1121
      %v1123 = vmul.f32 %v1000, 1.442695
      %v1124 = vpow.pop %v1123
      %v1125 = vmul.f32 %v1001, 1.442695
      %v1126 = vpow.pop %v1125
      %v1127 = vmul.f32 %v1002, 1.442695
      %v1128 = vpow.pop %v1127
      %v1129 = vmul.f32 %v1003, 1.442695
      %v1130 = vpow.pop %v1129
      %v1131 = vmul.f32 %v1004, 1.442695
      %v1132 = vpow.pop %v1131
      %v1133 = vadd.f32 %v1006, 1.0
      %v1134 = vadd.f32 %v1008, 1.0
      %v1135 = vadd.f32 %v1010, 1.0
      %v1136 = vadd.f32 %v1012, 1.0
      %v1137 = vadd.f32 %v1014, 1.0
      %v1138 = vadd.f32 %v1016, 1.0
      %v1139 = vadd.f32 %v1018, 1.0
      %v1140 = vadd.f32 %v1020, 1.0
      %v1141 = vadd.f32 %v1022, 1.0
      %v1142 = vadd.f32 %v1024, 1.0
      %v1143 = vadd.f32 %v1026, 1.0
      %v1144 = vadd.f32 %v1028, 1.0
      %v1145 = vadd.f32 %v1030, 1.0
      %v1146 = vadd.f32 %v1032, 1.0
      %v1147 = vadd.f32 %v1034, 1.0
      %v1148 = vadd.f32 %v1036, 1.0
      %v1149 = vadd.f32 %v1038, 1.0
      %v1150 = vadd.f32 %v1040, 1.0
      %v1151 = vadd.f32 %v1042, 1.0
      %v1152 = vadd.f32 %v1044, 1.0
      %v1153 = vadd.f32 %v1046, 1.0
      %v1154 = vadd.f32 %v1048, 1.0
      %v1155 = vadd.f32 %v1050, 1.0
      %v1156 = vadd.f32 %v1052, 1.0
      %v1157 = vadd.f32 %v1054, 1.0
      %v1158 = vadd.f32 %v1056, 1.0
      %v1159 = vadd.f32 %v1058, 1.0
      %v1160 = vadd.f32 %v1060, 1.0
      %v1161 = vadd.f32 %v1062, 1.0
      %v1162 = vadd.f32 %v1064, 1.0
      %v1163 = vadd.f32 %v1066, 1.0
      %v1164 = vadd.f32 %v1068, 1.0
      %v1165 = vadd.f32 %v1070, 1.0
      %v1166 = vadd.f32 %v1072, 1.0
      %v1167 = vadd.f32 %v1074, 1.0
      %v1168 = vadd.f32 %v1076, 1.0
      %v1169 = vadd.f32 %v1078, 1.0
      %v1170 = vadd.f32 %v1080, 1.0
      %v1171 = vadd.f32 %v1082, 1.0
      %v1172 = vadd.f32 %v1084, 1.0
      %v1173 = vadd.f32 %v1086, 1.0
      %v1174 = vadd.f32 %v1088, 1.0
      %v1175 = vadd.f32 %v1090, 1.0
      %v1176 = vadd.f32 %v1092, 1.0
      %v1177 = vadd.f32 %v1094, 1.0
      %v1178 = vadd.f32 %v1096, 1.0
      %v1179 = vadd.f32 %v1098, 1.0
      %v1180 = vadd.f32 %v1100, 1.0
      %v1181 = vadd.f32 %v1102, 1.0
      %v1182 = vadd.f32 %v1104, 1.0
      %v1183 = vadd.f32 %v1106, 1.0
      %v1184 = vadd.f32 %v1108, 1.0
      %v1185 = vadd.f32 %v1110, 1.0
      %v1186 = vadd.f32 %v1112, 1.0
      %v1187 = vadd.f32 %v1114, 1.0
      %v1188 = vadd.f32 %v1116, 1.0
      %v1189 = vadd.f32 %v1118, 1.0
      %v1190 = vadd.f32 %v1120, 1.0
      %v1191 = vadd.f32 %v1122, 1.0
      %v1192 = vadd.f32 %v1124, 1.0
      %v1193 = vadd.f32 %v1126, 1.0
      %v1194 = vadd.f32 %v1128, 1.0
      %v1195 = vadd.f32 %v1130, 1.0
      %v1196 = vadd.f32 %v1132, 1.0
      %v1197 = vrcp.pop %v1133
      %v1198 = vmul.f32 1.0, %v1197
      %v1199 = vrcp.pop %v1134
      %v1200 = vmul.f32 1.0, %v1199
      %v1201 = vrcp.pop %v1135
      %v1202 = vmul.f32 1.0, %v1201
      %v1203 = vrcp.pop %v1136
      %v1204 = vmul.f32 1.0, %v1203
      %v1205 = vrcp.pop %v1137
      %v1206 = vmul.f32 1.0, %v1205
      %v1207 = vrcp.pop %v1138
      %v1208 = vmul.f32 1.0, %v1207
      %v1209 = vrcp.pop %v1139
      %v1210 = vmul.f32 1.0, %v1209
      %v1211 = vrcp.pop %v1140
      %v1212 = vmul.f32 1.0, %v1211
      %v1213 = vrcp.pop %v1141
      %v1214 = vmul.f32 1.0, %v1213
      %v1215 = vrcp.pop %v1142
      %v1216 = vmul.f32 1.0, %v1215
      %v1217 = vrcp.pop %v1143
      %v1218 = vmul.f32 1.0, %v1217
      %v1219 = vrcp.pop %v1144
      %v1220 = vmul.f32 1.0, %v1219
      %v1221 = vrcp.pop %v1145
      %v1222 = vmul.f32 1.0, %v1221
      %v1223 = vrcp.pop %v1146
      %v1224 = vmul.f32 1.0, %v1223
      %v1225 = vrcp.pop %v1147
      %v1226 = vmul.f32 1.0, %v1225
      %v1227 = vrcp.pop %v1148
      %v1228 = vmul.f32 1.0, %v1227
      %v1229 = vrcp.pop %v1149
      %v1230 = vmul.f32 1.0, %v1229
      %v1231 = vrcp.pop %v1150
      %v1232 = vmul.f32 1.0, %v1231
      %v1233 = vrcp.pop %v1151
      %v1234 = vmul.f32 1.0, %v1233
      %v1235 = vrcp.pop %v1152
      %v1236 = vmul.f32 1.0, %v1235
      %v1237 = vrcp.pop %v1153
      %v1238 = vmul.f32 1.0, %v1237
      %v1239 = vrcp.pop %v1154
      %v1240 = vmul.f32 1.0, %v1239
      %v1241 = vrcp.pop %v1155
      %v1242 = vmul.f32 1.0, %v1241
      %v1243 = vrcp.pop %v1156
      %v1244 = vmul.f32 1.0, %v1243
      %v1245 = vrcp.pop %v1157
      %v1246 = vmul.f32 1.0, %v1245
      %v1247 = vrcp.pop %v1158
      %v1248 = vmul.f32 1.0, %v1247
      %v1249 = vrcp.pop %v1159
      %v1250 = vmul.f32 1.0, %v1249
      %v1251 = vrcp.pop %v1160
      %v1252 = vmul.f32 1.0, %v1251
      %v1253 = vrcp.pop %v1161
      %v1254 = vmul.f32 1.0, %v1253
      %v1255 = vrcp.pop %v1162
      %v1256 = vmul.f32 1.0, %v1255
      %v1257 = vrcp.pop %v1163
      %v1258 = vmul.f32 1.0, %v1257
      %v1259 = vrcp.pop %v1164
      %v1260 = vmul.f32 1.0, %v1259
      %v1261 = vrcp.pop %v1165
      %v1262 = vmul.f32 1.0, %v1261
      %v1263 = vrcp.pop %v1166
      %v1264 = vmul.f32 1.0, %v1263
      %v1265 = vrcp.pop %v1167
      %v1266 = vmul.f32 1.0, %v1265
      %v1267 = vrcp.pop %v1168
      %v1268 = vmul.f32 1.0, %v1267
      %v1269 = vrcp.pop %v1169
      %v1270 = vmul.f32 1.0, %v1269
      %v1271 = vrcp.pop %v1170
      %v1272 = vmul.f32 1.0, %v1271
      %v1273 = vrcp.pop %v1171
      %v1274 = vmul.f32 1.0, %v1273
      %v1275 = vrcp.pop %v1172
      %v1276 = vmul.f32 1.0, %v1275
      %v1277 = vrcp.pop %v1173
      %v1278 = vmul.f32 1.0, %v1277
      %v1279 = vrcp.pop %v1174
      %v1280 = vmul.f32 1.0, %v1279
      %v1281 = vrcp.pop %v1175
      %v1282 = vmul.f32 1.0, %v1281
      %v1283 = vrcp.pop %v1176
      %v1284 = vmul.f32 1.0, %v1283
      %v1285 = vrcp.pop %v1177
      %v1286 = vmul.f32 1.0, %v1285
      %v1287 = vrcp.pop %v1178
      %v1288 = vmul.f32 1.0, %v1287
      %v1289 = vrcp.pop %v1179
      %v1290 = vmul.f32 1.0, %v1289
      %v1291 = vrcp.pop %v1180
      %v1292 = vmul.f32 1.0, %v1291
      %v1293 = vrcp.pop %v1181
      %v1294 = vmul.f32 1.0, %v1293
      %v1295 = vrcp.pop %v1182
      %v1296 = vmul.f32 1.0, %v1295
      %v1297 = vrcp.pop %v1183
      %v1298 = vmul.f32 1.0, %v1297
      %v1299 = vrcp.pop %v1184
      %v1300 = vmul.f32 1.0, %v1299
      %v1301 = vrcp.pop %v1185
      %v1302 = vmul.f32 1.0, %v1301
      %v1303 = vrcp.pop %v1186
      %v1304 = vmul.f32 1.0, %v1303
      %v1305 = vrcp.pop %v1187
      %v1306 = vmul.f32 1.0, %v1305
      %v1307 = vrcp.pop %v1188
      %v1308 = vmul.f32 1.0, %v1307
      %v1309 = vrcp.pop %v1189
      %v1310 = vmul.f32 1.0, %v1309
      %v1311 = vrcp.pop %v1190
      %v1312 = vmul.f32 1.0, %v1311
      %v1313 = vrcp.pop %v1191
      %v1314 = vmul.f32 1.0, %v1313
      %v1315 = vrcp.pop %v1192
      %v1316 = vmul.f32 1.0, %v1315
      %v1317 = vrcp.pop %v1193
      %v1318 = vmul.f32 1.0, %v1317
      %v1319 = vrcp.pop %v1194
      %v1320 = vmul.f32 1.0, %v1319
      %v1321 = vrcp.pop %v1195
      %v1322 = vmul.f32 1.0, %v1321
      %v1323 = vrcp.pop %v1196
      %v1324 = vmul.f32 1.0, %v1323
      %v1325 = vmul.f32 %v687, %v1198
      %v1326 = vmul.f32 %v690, %v1200
      %v1327 = vmul.f32 %v695, %v1202
      %v1328 = vmul.f32 %v698, %v1204
      %v1329 = vmul.f32 %v703, %v1206
      %v1330 = vmul.f32 %v706, %v1208
      %v1331 = vmul.f32 %v711, %v1210
      %v1332 = vmul.f32 %v714, %v1212
      %v1333 = vmul.f32 %v719, %v1214
      %v1334 = vmul.f32 %v722, %v1216
      %v1335 = vmul.f32 %v727, %v1218
      %v1336 = vmul.f32 %v730, %v1220
      %v1337 = vmul.f32 %v735, %v1222
      %v1338 = vmul.f32 %v738, %v1224
      %v1339 = vmul.f32 %v743, %v1226
      %v1340 = vmul.f32 %v746, %v1228
      %v1341 = vmul.f32 %v751, %v1230
      %v1342 = vmul.f32 %v754, %v1232
      %v1343 = vmul.f32 %v759, %v1234
      %v1344 = vmul.f32 %v762, %v1236
      %v1345 = vmul.f32 %v767, %v1238
      %v1346 = vmul.f32 %v770, %v1240
      %v1347 = vmul.f32 %v775, %v1242
      %v1348 = vmul.f32 %v778, %v1244
      %v1349 = vmul.f32 %v783, %v1246
      %v1350 = vmul.f32 %v786, %v1248
      %v1351 = vmul.f32 %v791, %v1250
      %v1352 = vmul.f32 %v794, %v1252
      %v1353 = vmul.f32 %v799, %v1254
      %v1354 = vmul.f32 %v802, %v1256
      %v1355 = vmul.f32 %v807, %v1258
      %v1356 = vmul.f32 %v810, %v1260
      %v1357 = vmul.f32 %v815, %v1262
      %v1358 = vmul.f32 %v818, %v1264
      %v1359 = vmul.f32 %v823, %v1266
      %v1360 = vmul.f32 %v826, %v1268
      %v1361 = vmul.f32 %v831, %v1270
      %v1362 = vmul.f32 %v834, %v1272
      %v1363 = vmul.f32 %v839, %v1274
      %v1364 = vmul.f32 %v842, %v1276
      %v1365 = vmul.f32 %v847, %v1278
      %v1366 = vmul.f32 %v850, %v1280
      %v1367 = vmul.f32 %v855, %v1282
      %v1368 = vmul.f32 %v858, %v1284
      %v1369 = vmul.f32 %v863, %v1286
      %v1370 = vmul.f32 %v866, %v1288
      %v1371 = vmul.f32 %v871, %v1290
      %v1372 = vmul.f32 %v874, %v1292
      %v1373 = vmul.f32 %v879, %v1294
      %v1374 = vmul.f32 %v882, %v1296
      %v1375 = vmul.f32 %v887, %v1298
      %v1376 = vmul.f32 %v890, %v1300
      %v1377 = vmul.f32 %v895, %v1302
      %v1378 = vmul.f32 %v898, %v1304
      %v1379 = vmul.f32 %v903, %v1306
      %v1380 = vmul.f32 %v906, %v1308
      %v1381 = vmul.f32 %v911, %v1310
      %v1382 = vmul.f32 %v914, %v1312
      %v1383 = vmul.f32 %v919, %v1314
      %v1384 = vmul.f32 %v922, %v1316
      %v1385 = vmul.f32 %v927, %v1318
      %v1386 = vmul.f32 %v930, %v1320
      %v1387 = vmul.f32 %v935, %v1322
      %v1388 = vmul.f32 %v938, %v1324
      %v1389 = vpack.c.bf16 %v1326, %v1325
      %v1390 = vpack.c.bf16 %v1328, %v1327
      %v1391 = vpack.c.bf16 %v1330, %v1329
      %v1392 = vpack.c.bf16 %v1332, %v1331
      %v1393 = vpack.c.bf16 %v1334, %v1333
      %v1394 = vpack.c.bf16 %v1336, %v1335
      %v1395 = vpack.c.bf16 %v1338, %v1337
      %v1396 = vpack.c.bf16 %v1340, %v1339
      %v1397 = vpack.c.bf16 %v1342, %v1341
      %v1398 = vpack.c.bf16 %v1344, %v1343
      %v1399 = vpack.c.bf16 %v1346, %v1345
      %v1400 = vpack.c.bf16 %v1348, %v1347
      %v1401 = vpack.c.bf16 %v1350, %v1349
      %v1402 = vpack.c.bf16 %v1352, %v1351
      %v1403 = vpack.c.bf16 %v1354, %v1353
      %v1404 = vpack.c.bf16 %v1356, %v1355
      %v1405 = vpack.c.bf16 %v1358, %v1357
      %v1406 = vpack.c.bf16 %v1360, %v1359
      %v1407 = vpack.c.bf16 %v1362, %v1361
      %v1408 = vpack.c.bf16 %v1364, %v1363
      %v1409 = vpack.c.bf16 %v1366, %v1365
      %v1410 = vpack.c.bf16 %v1368, %v1367
      %v1411 = vpack.c.bf16 %v1370, %v1369
      %v1412 = vpack.c.bf16 %v1372, %v1371
      %v1413 = vpack.c.bf16 %v1374, %v1373
      %v1414 = vpack.c.bf16 %v1376, %v1375
      %v1415 = vpack.c.bf16 %v1378, %v1377
      %v1416 = vpack.c.bf16 %v1380, %v1379
      %v1417 = vpack.c.bf16 %v1382, %v1381
      %v1418 = vpack.c.bf16 %v1384, %v1383
      %v1419 = vpack.c.bf16 %v1386, %v1385
      %v1420 = vpack.c.bf16 %v1388, %v1387
      %v1421 = vld [vmem:[%s3] sm:$0xf]
      %v1422 = vld [vmem:[%s3 + $0x4] sm:$0xf]
      %v1423 = vld [vmem:[%s3 + $0x8] sm:$0xf]
      %v1424 = vld [vmem:[%s3 + $0xc] sm:$0xf]
      %v1425 = vld [vmem:[%s4] sm:$0x1]
      %v1427 = vlaneseq
      %v1428 = vshrl.u32 %v1427, 7
      %v1429 = vsub.s32 0, %v1428
      %v1430 = vrot.slane %v1425, %v1429
      %v1436 = vunpack.c.l.b16 %v1421
      %v1437 = vunpack.c.l.b16 %v1422
      %v1438 = vunpack.c.l.b16 %v1423
      %v1439 = vunpack.c.l.b16 %v1424
      %v1440 = vpack.c.b16 %v1437, %v1436
      %v1441 = vpack.c.b16 %v1439, %v1438
      %v1445 = vsel %vm555, %v1389, 0
      %v1448 = vsel %vm555, %v1390, 0
      %v1451 = vsel %vm555, %v1391, 0
      %v1454 = vsel %vm555, %v1392, 0
      %v1457 = vsel %vm555, %v1393, 0
      %v1460 = vsel %vm555, %v1394, 0
      %v1463 = vsel %vm555, %v1395, 0
      %v1466 = vsel %vm555, %v1396, 0
      %v1469 = vsel %vm555, %v1397, 0
      %v1472 = vsel %vm555, %v1398, 0
      %v1475 = vsel %vm555, %v1399, 0
      %v1478 = vsel %vm555, %v1400, 0
      %v1481 = vsel %vm555, %v1401, 0
      %v1484 = vsel %vm555, %v1402, 0
      %v1487 = vsel %vm555, %v1403, 0
      %v1490 = vsel %vm555, %v1404, 0
      %v1493 = vsel %vm555, %v1405, 0
      %v1496 = vsel %vm555, %v1406, 0
      %v1499 = vsel %vm555, %v1407, 0
      %v1502 = vsel %vm555, %v1408, 0
      %v1505 = vsel %vm555, %v1409, 0
      %v1508 = vsel %vm555, %v1410, 0
      %v1511 = vsel %vm555, %v1411, 0
      %v1514 = vsel %vm555, %v1412, 0
      %v1517 = vsel %vm555, %v1413, 0
      %v1520 = vsel %vm555, %v1414, 0
      %v1523 = vsel %vm555, %v1415, 0
      %v1526 = vsel %vm555, %v1416, 0
      %v1529 = vsel %vm555, %v1417, 0
      %v1532 = vsel %vm555, %v1418, 0
      %v1535 = vsel %vm555, %v1419, 0
      %v1538 = vsel %vm555, %v1420, 0
      %1540 = vmatprep.subr.bf16.mxu0 0
      %1541 = vmatpush1.bf16.msra.mxu0 0
      %1542 = vmatprep.subr.bf16.mxu0 0
      %1543 = vmatpush1.bf16.msra.mxu0 0
      %1544 = vmatprep.subr.bf16.mxu0 0
      %1545 = vmatpush1.bf16.msra.mxu0 0
      %1546 = vmatprep.subr.bf16.mxu0 0
      %1547 = vmatpush1.bf16.msra.mxu0 0
      %1548 = vmatprep.subr.bf16.mxu0 0
      %1549 = vmatpush1.bf16.msra.mxu0 0
      %1550 = vmatprep.subr.bf16.mxu0 0
      %1551 = vmatpush1.bf16.msra.mxu0 0
      %1552 = vmatprep.subr.bf16.mxu0 0
      %1553 = vmatpush1.bf16.msra.mxu0 %v1441
      %1554 = vmatprep.subr.bf16.mxu0 0
      %1555 = vmatpush1.bf16.msra.mxu0 %v1440
      %1556 = vmatprep.subr.bf16.mxu0 0
      %1557 = vmatpush2.bf16.msra.mxu0 0
      %1558 = vmatprep.subr.bf16.mxu0 0
      %1559 = vmatpush2.bf16.msra.mxu0 0
      %1560 = vmatprep.subr.bf16.mxu0 0
      %1561 = vmatpush2.bf16.msra.mxu0 0
      %1562 = vmatprep.subr.bf16.mxu0 0
      %1563 = vmatpush2.bf16.msra.mxu0 0
      %1564 = vmatprep.subr.bf16.mxu0 0
      %1565 = vmatpush2.bf16.msra.mxu0 0
      %1566 = vmatprep.subr.bf16.mxu0 0
      %1567 = vmatpush2.bf16.msra.mxu0 0
      %1568 = vmatprep.subr.bf16.mxu0 0
      %1569 = vmatpush2.bf16.msra.mxu0 0
      %1570 = vmatprep.subr.bf16.mxu0 0
      %1571 = vmatpush2.bf16.msra.mxu0 0
      %1572 = vmatprep.mubr.bf16.mxu0 0
      %1573 = vmatmul.mubr.bf16.gmra.mxu0 %v1445
      %v1574 = vpop.f32.mrf.mxu0
      %v1575 = vadd.f32 %v1430, %v1574
      %v1576 = vpop.f32.mrf.mxu0
      %v1577 = vpop.f32.mrf.mxu0
      %v1578 = vadd.f32 %v1430, %v1577
      %v1579 = vpop.f32.mrf.mxu0
      %1580 = vmatprep.mubr.bf16.mxu0 0
      %1581 = vmatmul.mubr.bf16.gmra.mxu0 %v1448
      %v1582 = vpop.f32.mrf.mxu0
      %v1583 = vadd.f32 %v1430, %v1582
      %v1584 = vpop.f32.mrf.mxu0
      %v1585 = vpop.f32.mrf.mxu0
      %v1586 = vadd.f32 %v1430, %v1585
      %v1587 = vpop.f32.mrf.mxu0
      %1588 = vmatprep.mubr.bf16.mxu0 0
      %1589 = vmatmul.mubr.bf16.gmra.mxu0 %v1451
      %v1590 = vpop.f32.mrf.mxu0
      %v1591 = vadd.f32 %v1430, %v1590
      %v1592 = vpop.f32.mrf.mxu0
      %v1593 = vpop.f32.mrf.mxu0
      %v1594 = vadd.f32 %v1430, %v1593
      %v1595 = vpop.f32.mrf.mxu0
      %1596 = vmatprep.mubr.bf16.mxu0 0
      %1597 = vmatmul.mubr.bf16.gmra.mxu0 %v1454
      %v1598 = vpop.f32.mrf.mxu0
      %v1599 = vadd.f32 %v1430, %v1598
      %v1600 = vpop.f32.mrf.mxu0
      %v1601 = vpop.f32.mrf.mxu0
      %v1602 = vadd.f32 %v1430, %v1601
      %v1603 = vpop.f32.mrf.mxu0
      %1604 = vmatprep.mubr.bf16.mxu0 0
      %1605 = vmatmul.mubr.bf16.gmra.mxu0 %v1457
      %v1606 = vpop.f32.mrf.mxu0
      %v1607 = vadd.f32 %v1430, %v1606
      %v1608 = vpop.f32.mrf.mxu0
      %v1609 = vpop.f32.mrf.mxu0
      %v1610 = vadd.f32 %v1430, %v1609
      %v1611 = vpop.f32.mrf.mxu0
      %1612 = vmatprep.mubr.bf16.mxu0 0
      %1613 = vmatmul.mubr.bf16.gmra.mxu0 %v1460
      %v1614 = vpop.f32.mrf.mxu0
      %v1615 = vadd.f32 %v1430, %v1614
      %v1616 = vpop.f32.mrf.mxu0
      %v1617 = vpop.f32.mrf.mxu0
      %v1618 = vadd.f32 %v1430, %v1617
      %v1619 = vpop.f32.mrf.mxu0
      %1620 = vmatprep.mubr.bf16.mxu0 0
      %1621 = vmatmul.mubr.bf16.gmra.mxu0 %v1463
      %v1622 = vpop.f32.mrf.mxu0
      %v1623 = vadd.f32 %v1430, %v1622
      %v1624 = vpop.f32.mrf.mxu0
      %v1625 = vpop.f32.mrf.mxu0
      %v1626 = vadd.f32 %v1430, %v1625
      %v1627 = vpop.f32.mrf.mxu0
      %1628 = vmatprep.mubr.bf16.mxu0 0
      %1629 = vmatmul.mubr.bf16.gmra.mxu0 %v1466
      %v1630 = vpop.f32.mrf.mxu0
      %v1631 = vadd.f32 %v1430, %v1630
      %v1632 = vpop.f32.mrf.mxu0
      %v1633 = vpop.f32.mrf.mxu0
      %v1634 = vadd.f32 %v1430, %v1633
      %v1635 = vpop.f32.mrf.mxu0
      %1636 = vmatprep.mubr.bf16.mxu0 0
      %1637 = vmatmul.mubr.bf16.gmra.mxu0 %v1469
      %v1638 = vpop.f32.mrf.mxu0
      %v1639 = vadd.f32 %v1430, %v1638
      %v1640 = vpop.f32.mrf.mxu0
      %v1641 = vpop.f32.mrf.mxu0
      %v1642 = vadd.f32 %v1430, %v1641
      %v1643 = vpop.f32.mrf.mxu0
      %1644 = vmatprep.mubr.bf16.mxu0 0
      %1645 = vmatmul.mubr.bf16.gmra.mxu0 %v1472
      %v1646 = vpop.f32.mrf.mxu0
      %v1647 = vadd.f32 %v1430, %v1646
      %v1648 = vpop.f32.mrf.mxu0
      %v1649 = vpop.f32.mrf.mxu0
      %v1650 = vadd.f32 %v1430, %v1649
      %v1651 = vpop.f32.mrf.mxu0
      %1652 = vmatprep.mubr.bf16.mxu0 0
      %1653 = vmatmul.mubr.bf16.gmra.mxu0 %v1475
      %v1654 = vpop.f32.mrf.mxu0
      %v1655 = vadd.f32 %v1430, %v1654
      %v1656 = vpop.f32.mrf.mxu0
      %v1657 = vpop.f32.mrf.mxu0
      %v1658 = vadd.f32 %v1430, %v1657
      %v1659 = vpop.f32.mrf.mxu0
      %1660 = vmatprep.mubr.bf16.mxu0 0
      %1661 = vmatmul.mubr.bf16.gmra.mxu0 %v1478
      %v1662 = vpop.f32.mrf.mxu0
      %v1663 = vadd.f32 %v1430, %v1662
      %v1664 = vpop.f32.mrf.mxu0
      %v1665 = vpop.f32.mrf.mxu0
      %v1666 = vadd.f32 %v1430, %v1665
      %v1667 = vpop.f32.mrf.mxu0
      %1668 = vmatprep.mubr.bf16.mxu0 0
      %1669 = vmatmul.mubr.bf16.gmra.mxu0 %v1481
      %v1670 = vpop.f32.mrf.mxu0
      %v1671 = vadd.f32 %v1430, %v1670
      %v1672 = vpop.f32.mrf.mxu0
      %v1673 = vpop.f32.mrf.mxu0
      %v1674 = vadd.f32 %v1430, %v1673
      %v1675 = vpop.f32.mrf.mxu0
      %1676 = vmatprep.mubr.bf16.mxu0 0
      %1677 = vmatmul.mubr.bf16.gmra.mxu0 %v1484
      %v1678 = vpop.f32.mrf.mxu0
      %v1679 = vadd.f32 %v1430, %v1678
      %v1680 = vpop.f32.mrf.mxu0
      %v1681 = vpop.f32.mrf.mxu0
      %v1682 = vadd.f32 %v1430, %v1681
      %v1683 = vpop.f32.mrf.mxu0
      %1684 = vmatprep.mubr.bf16.mxu0 0
      %1685 = vmatmul.mubr.bf16.gmra.mxu0 %v1487
      %v1686 = vpop.f32.mrf.mxu0
      %v1687 = vadd.f32 %v1430, %v1686
      %v1688 = vpop.f32.mrf.mxu0
      %v1689 = vpop.f32.mrf.mxu0
      %v1690 = vadd.f32 %v1430, %v1689
      %v1691 = vpop.f32.mrf.mxu0
      %1692 = vmatprep.mubr.bf16.mxu0 0
      %1693 = vmatmul.mubr.bf16.gmra.mxu0 %v1490
      %v1694 = vpop.f32.mrf.mxu0
      %v1695 = vadd.f32 %v1430, %v1694
      %v1696 = vpop.f32.mrf.mxu0
      %v1697 = vpop.f32.mrf.mxu0
      %v1698 = vadd.f32 %v1430, %v1697
      %v1699 = vpop.f32.mrf.mxu0
      %1700 = vmatprep.mubr.bf16.mxu0 0
      %1701 = vmatmul.mubr.bf16.gmra.mxu0 %v1493
      %v1702 = vpop.f32.mrf.mxu0
      %v1703 = vadd.f32 %v1430, %v1702
      %v1704 = vpop.f32.mrf.mxu0
      %v1705 = vpop.f32.mrf.mxu0
      %v1706 = vadd.f32 %v1430, %v1705
      %v1707 = vpop.f32.mrf.mxu0
      %1708 = vmatprep.mubr.bf16.mxu0 0
      %1709 = vmatmul.mubr.bf16.gmra.mxu0 %v1496
      %v1710 = vpop.f32.mrf.mxu0
      %v1711 = vadd.f32 %v1430, %v1710
      %v1712 = vpop.f32.mrf.mxu0
      %v1713 = vpop.f32.mrf.mxu0
      %v1714 = vadd.f32 %v1430, %v1713
      %v1715 = vpop.f32.mrf.mxu0
      %1716 = vmatprep.mubr.bf16.mxu0 0
      %1717 = vmatmul.mubr.bf16.gmra.mxu0 %v1499
      %v1718 = vpop.f32.mrf.mxu0
      %v1719 = vadd.f32 %v1430, %v1718
      %v1720 = vpop.f32.mrf.mxu0
      %v1721 = vpop.f32.mrf.mxu0
      %v1722 = vadd.f32 %v1430, %v1721
      %v1723 = vpop.f32.mrf.mxu0
      %1724 = vmatprep.mubr.bf16.mxu0 0
      %1725 = vmatmul.mubr.bf16.gmra.mxu0 %v1502
      %v1726 = vpop.f32.mrf.mxu0
      %v1727 = vadd.f32 %v1430, %v1726
      %v1728 = vpop.f32.mrf.mxu0
      %v1729 = vpop.f32.mrf.mxu0
      %v1730 = vadd.f32 %v1430, %v1729
      %v1731 = vpop.f32.mrf.mxu0
      %1732 = vmatprep.mubr.bf16.mxu0 0
      %1733 = vmatmul.mubr.bf16.gmra.mxu0 %v1505
      %v1734 = vpop.f32.mrf.mxu0
      %v1735 = vadd.f32 %v1430, %v1734
      %v1736 = vpop.f32.mrf.mxu0
      %v1737 = vpop.f32.mrf.mxu0
      %v1738 = vadd.f32 %v1430, %v1737
      %v1739 = vpop.f32.mrf.mxu0
      %1740 = vmatprep.mubr.bf16.mxu0 0
      %1741 = vmatmul.mubr.bf16.gmra.mxu0 %v1508
      %v1742 = vpop.f32.mrf.mxu0
      %v1743 = vadd.f32 %v1430, %v1742
      %v1744 = vpop.f32.mrf.mxu0
      %v1745 = vpop.f32.mrf.mxu0
      %v1746 = vadd.f32 %v1430, %v1745
      %v1747 = vpop.f32.mrf.mxu0
      %1748 = vmatprep.mubr.bf16.mxu0 0
      %1749 = vmatmul.mubr.bf16.gmra.mxu0 %v1511
      %v1750 = vpop.f32.mrf.mxu0
      %v1751 = vadd.f32 %v1430, %v1750
      %v1752 = vpop.f32.mrf.mxu0
      %v1753 = vpop.f32.mrf.mxu0
      %v1754 = vadd.f32 %v1430, %v1753
      %v1755 = vpop.f32.mrf.mxu0
      %1756 = vmatprep.mubr.bf16.mxu0 0
      %1757 = vmatmul.mubr.bf16.gmra.mxu0 %v1514
      %v1758 = vpop.f32.mrf.mxu0
      %v1759 = vadd.f32 %v1430, %v1758
      %v1760 = vpop.f32.mrf.mxu0
      %v1761 = vpop.f32.mrf.mxu0
      %v1762 = vadd.f32 %v1430, %v1761
      %v1763 = vpop.f32.mrf.mxu0
      %1764 = vmatprep.mubr.bf16.mxu0 0
      %1765 = vmatmul.mubr.bf16.gmra.mxu0 %v1517
      %v1766 = vpop.f32.mrf.mxu0
      %v1767 = vadd.f32 %v1430, %v1766
      %v1768 = vpop.f32.mrf.mxu0
      %v1769 = vpop.f32.mrf.mxu0
      %v1770 = vadd.f32 %v1430, %v1769
      %v1771 = vpop.f32.mrf.mxu0
      %1772 = vmatprep.mubr.bf16.mxu0 0
      %1773 = vmatmul.mubr.bf16.gmra.mxu0 %v1520
      %v1774 = vpop.f32.mrf.mxu0
      %v1775 = vadd.f32 %v1430, %v1774
      %v1776 = vpop.f32.mrf.mxu0
      %v1777 = vpop.f32.mrf.mxu0
      %v1778 = vadd.f32 %v1430, %v1777
      %v1779 = vpop.f32.mrf.mxu0
      %1780 = vmatprep.mubr.bf16.mxu0 0
      %1781 = vmatmul.mubr.bf16.gmra.mxu0 %v1523
      %v1782 = vpop.f32.mrf.mxu0
      %v1783 = vadd.f32 %v1430, %v1782
      %v1784 = vpop.f32.mrf.mxu0
      %v1785 = vpop.f32.mrf.mxu0
      %v1786 = vadd.f32 %v1430, %v1785
      %v1787 = vpop.f32.mrf.mxu0
      %1788 = vmatprep.mubr.bf16.mxu0 0
      %1789 = vmatmul.mubr.bf16.gmra.mxu0 %v1526
      %v1790 = vpop.f32.mrf.mxu0
      %v1791 = vadd.f32 %v1430, %v1790
      %v1792 = vpop.f32.mrf.mxu0
      %v1793 = vpop.f32.mrf.mxu0
      %v1794 = vadd.f32 %v1430, %v1793
      %v1795 = vpop.f32.mrf.mxu0
      %1796 = vmatprep.mubr.bf16.mxu0 0
      %1797 = vmatmul.mubr.bf16.gmra.mxu0 %v1529
      %v1798 = vpop.f32.mrf.mxu0
      %v1799 = vadd.f32 %v1430, %v1798
      %v1800 = vpop.f32.mrf.mxu0
      %v1801 = vpop.f32.mrf.mxu0
      %v1802 = vadd.f32 %v1430, %v1801
      %v1803 = vpop.f32.mrf.mxu0
      %1804 = vmatprep.mubr.bf16.mxu0 0
      %1805 = vmatmul.mubr.bf16.gmra.mxu0 %v1532
      %v1806 = vpop.f32.mrf.mxu0
      %v1807 = vadd.f32 %v1430, %v1806
      %v1808 = vpop.f32.mrf.mxu0
      %v1809 = vpop.f32.mrf.mxu0
      %v1810 = vadd.f32 %v1430, %v1809
      %v1811 = vpop.f32.mrf.mxu0
      %1812 = vmatprep.mubr.bf16.mxu0 0
      %1813 = vmatmul.mubr.bf16.gmra.mxu0 %v1535
      %v1814 = vpop.f32.mrf.mxu0
      %v1815 = vadd.f32 %v1430, %v1814
      %v1816 = vpop.f32.mrf.mxu0
      %v1817 = vpop.f32.mrf.mxu0
      %v1818 = vadd.f32 %v1430, %v1817
      %v1819 = vpop.f32.mrf.mxu0
      %1820 = vmatprep.mubr.bf16.mxu0 0
      %1821 = vmatmul.mubr.bf16.gmra.mxu0 %v1538
      %v1822 = vpop.f32.mrf.mxu0
      %v1823 = vadd.f32 %v1430, %v1822
      %v1824 = vpop.f32.mrf.mxu0
      %v1825 = vpop.f32.mrf.mxu0
      %v1826 = vadd.f32 %v1430, %v1825
      %v1827 = vpop.f32.mrf.mxu0
      %1828 = vdwg.mxu0
      %v1829 = vxor.u32 %v1575, 2147483648
      %v1830 = vxor.u32 %v1578, 2147483648
      %v1831 = vxor.u32 %v1583, 2147483648
      %v1832 = vxor.u32 %v1586, 2147483648
      %v1833 = vxor.u32 %v1591, 2147483648
      %v1834 = vxor.u32 %v1594, 2147483648
      %v1835 = vxor.u32 %v1599, 2147483648
      %v1836 = vxor.u32 %v1602, 2147483648
      %v1837 = vxor.u32 %v1607, 2147483648
      %v1838 = vxor.u32 %v1610, 2147483648
      %v1839 = vxor.u32 %v1615, 2147483648
      %v1840 = vxor.u32 %v1618, 2147483648
      %v1841 = vxor.u32 %v1623, 2147483648
      %v1842 = vxor.u32 %v1626, 2147483648
      %v1843 = vxor.u32 %v1631, 2147483648
      %v1844 = vxor.u32 %v1634, 2147483648
      %v1845 = vxor.u32 %v1639, 2147483648
      %v1846 = vxor.u32 %v1642, 2147483648
      %v1847 = vxor.u32 %v1647, 2147483648
      %v1848 = vxor.u32 %v1650, 2147483648
      %v1849 = vxor.u32 %v1655, 2147483648
      %v1850 = vxor.u32 %v1658, 2147483648
      %v1851 = vxor.u32 %v1663, 2147483648
      %v1852 = vxor.u32 %v1666, 2147483648
      %v1853 = vxor.u32 %v1671, 2147483648
      %v1854 = vxor.u32 %v1674, 2147483648
      %v1855 = vxor.u32 %v1679, 2147483648
      %v1856 = vxor.u32 %v1682, 2147483648
      %v1857 = vxor.u32 %v1687, 2147483648
      %v1858 = vxor.u32 %v1690, 2147483648
      %v1859 = vxor.u32 %v1695, 2147483648
      %v1860 = vxor.u32 %v1698, 2147483648
      %v1861 = vxor.u32 %v1703, 2147483648
      %v1862 = vxor.u32 %v1706, 2147483648
      %v1863 = vxor.u32 %v1711, 2147483648
      %v1864 = vxor.u32 %v1714, 2147483648
      %v1865 = vxor.u32 %v1719, 2147483648
      %v1866 = vxor.u32 %v1722, 2147483648
      %v1867 = vxor.u32 %v1727, 2147483648
      %v1868 = vxor.u32 %v1730, 2147483648
      %v1869 = vxor.u32 %v1735, 2147483648
      %v1870 = vxor.u32 %v1738, 2147483648
      %v1871 = vxor.u32 %v1743, 2147483648
      %v1872 = vxor.u32 %v1746, 2147483648
      %v1873 = vxor.u32 %v1751, 2147483648
      %v1874 = vxor.u32 %v1754, 2147483648
      %v1875 = vxor.u32 %v1759, 2147483648
      %v1876 = vxor.u32 %v1762, 2147483648
      %v1877 = vxor.u32 %v1767, 2147483648
      %v1878 = vxor.u32 %v1770, 2147483648
      %v1879 = vxor.u32 %v1775, 2147483648
      %v1880 = vxor.u32 %v1778, 2147483648
      %v1881 = vxor.u32 %v1783, 2147483648
      %v1882 = vxor.u32 %v1786, 2147483648
      %v1883 = vxor.u32 %v1791, 2147483648
      %v1884 = vxor.u32 %v1794, 2147483648
      %v1885 = vxor.u32 %v1799, 2147483648
      %v1886 = vxor.u32 %v1802, 2147483648
      %v1887 = vxor.u32 %v1807, 2147483648
      %v1888 = vxor.u32 %v1810, 2147483648
      %v1889 = vxor.u32 %v1815, 2147483648
      %v1890 = vxor.u32 %v1818, 2147483648
      %v1891 = vxor.u32 %v1823, 2147483648
      %v1892 = vxor.u32 %v1826, 2147483648
      %v1893 = vmul.f32 %v1829, 1.442695
      %v1894 = vpow.pop %v1893
      %v1895 = vmul.f32 %v1830, 1.442695
      %v1896 = vpow.pop %v1895
      %v1897 = vmul.f32 %v1831, 1.442695
      %v1898 = vpow.pop %v1897
      %v1899 = vmul.f32 %v1832, 1.442695
      %v1900 = vpow.pop %v1899
      %v1901 = vmul.f32 %v1833, 1.442695
      %v1902 = vpow.pop %v1901
      %v1903 = vmul.f32 %v1834, 1.442695
      %v1904 = vpow.pop %v1903
      %v1905 = vmul.f32 %v1835, 1.442695
      %v1906 = vpow.pop %v1905
      %v1907 = vmul.f32 %v1836, 1.442695
      %v1908 = vpow.pop %v1907
      %v1909 = vmul.f32 %v1837, 1.442695
      %v1910 = vpow.pop %v1909
      %v1911 = vmul.f32 %v1838, 1.442695
      %v1912 = vpow.pop %v1911
      %v1913 = vmul.f32 %v1839, 1.442695
      %v1914 = vpow.pop %v1913
      %v1915 = vmul.f32 %v1840, 1.442695
      %v1916 = vpow.pop %v1915
      %v1917 = vmul.f32 %v1841, 1.442695
      %v1918 = vpow.pop %v1917
      %v1919 = vmul.f32 %v1842, 1.442695
      %v1920 = vpow.pop %v1919
      %v1921 = vmul.f32 %v1843, 1.442695
      %v1922 = vpow.pop %v1921
      %v1923 = vmul.f32 %v1844, 1.442695
      %v1924 = vpow.pop %v1923
      %v1925 = vmul.f32 %v1845, 1.442695
      %v1926 = vpow.pop %v1925
      %v1927 = vmul.f32 %v1846, 1.442695
      %v1928 = vpow.pop %v1927
      %v1929 = vmul.f32 %v1847, 1.442695
      %v1930 = vpow.pop %v1929
      %v1931 = vmul.f32 %v1848, 1.442695
      %v1932 = vpow.pop %v1931
      %v1933 = vmul.f32 %v1849, 1.442695
      %v1934 = vpow.pop %v1933
      %v1935 = vmul.f32 %v1850, 1.442695
      %v1936 = vpow.pop %v1935
      %v1937 = vmul.f32 %v1851, 1.442695
      %v1938 = vpow.pop %v1937
      %v1939 = vmul.f32 %v1852, 1.442695
      %v1940 = vpow.pop %v1939
      %v1941 = vmul.f32 %v1853, 1.442695
      %v1942 = vpow.pop %v1941
      %v1943 = vmul.f32 %v1854, 1.442695
      %v1944 = vpow.pop %v1943
      %v1945 = vmul.f32 %v1855, 1.442695
      %v1946 = vpow.pop %v1945
      %v1947 = vmul.f32 %v1856, 1.442695
      %v1948 = vpow.pop %v1947
      %v1949 = vmul.f32 %v1857, 1.442695
      %v1950 = vpow.pop %v1949
      %v1951 = vmul.f32 %v1858, 1.442695
      %v1952 = vpow.pop %v1951
      %v1953 = vmul.f32 %v1859, 1.442695
      %v1954 = vpow.pop %v1953
      %v1955 = vmul.f32 %v1860, 1.442695
      %v1956 = vpow.pop %v1955
      %v1957 = vmul.f32 %v1861, 1.442695
      %v1958 = vpow.pop %v1957
      %v1959 = vmul.f32 %v1862, 1.442695
      %v1960 = vpow.pop %v1959
      %v1961 = vmul.f32 %v1863, 1.442695
      %v1962 = vpow.pop %v1961
      %v1963 = vmul.f32 %v1864, 1.442695
      %v1964 = vpow.pop %v1963
      %v1965 = vmul.f32 %v1865, 1.442695
      %v1966 = vpow.pop %v1965
      %v1967 = vmul.f32 %v1866, 1.442695
      %v1968 = vpow.pop %v1967
      %v1969 = vmul.f32 %v1867, 1.442695
      %v1970 = vpow.pop %v1969
      %v1971 = vmul.f32 %v1868, 1.442695
      %v1972 = vpow.pop %v1971
      %v1973 = vmul.f32 %v1869, 1.442695
      %v1974 = vpow.pop %v1973
      %v1975 = vmul.f32 %v1870, 1.442695
      %v1976 = vpow.pop %v1975
      %v1977 = vmul.f32 %v1871, 1.442695
      %v1978 = vpow.pop %v1977
      %v1979 = vmul.f32 %v1872, 1.442695
      %v1980 = vpow.pop %v1979
      %v1981 = vmul.f32 %v1873, 1.442695
      %v1982 = vpow.pop %v1981
      %v1983 = vmul.f32 %v1874, 1.442695
      %v1984 = vpow.pop %v1983
      %v1985 = vmul.f32 %v1875, 1.442695
      %v1986 = vpow.pop %v1985
      %v1987 = vmul.f32 %v1876, 1.442695
      %v1988 = vpow.pop %v1987
      %v1989 = vmul.f32 %v1877, 1.442695
      %v1990 = vpow.pop %v1989
      %v1991 = vmul.f32 %v1878, 1.442695
      %v1992 = vpow.pop %v1991
      %v1993 = vmul.f32 %v1879, 1.442695
      %v1994 = vpow.pop %v1993
      %v1995 = vmul.f32 %v1880, 1.442695
      %v1996 = vpow.pop %v1995
      %v1997 = vmul.f32 %v1881, 1.442695
      %v1998 = vpow.pop %v1997
      %v1999 = vmul.f32 %v1882, 1.442695
      %v2000 = vpow.pop %v1999
      %v2001 = vmul.f32 %v1883, 1.442695
      %v2002 = vpow.pop %v2001
      %v2003 = vmul.f32 %v1884, 1.442695
      %v2004 = vpow.pop %v2003
      %v2005 = vmul.f32 %v1885, 1.442695
      %v2006 = vpow.pop %v2005
      %v2007 = vmul.f32 %v1886, 1.442695
      %v2008 = vpow.pop %v2007
      %v2009 = vmul.f32 %v1887, 1.442695
      %v2010 = vpow.pop %v2009
      %v2011 = vmul.f32 %v1888, 1.442695
      %v2012 = vpow.pop %v2011
      %v2013 = vmul.f32 %v1889, 1.442695
      %v2014 = vpow.pop %v2013
      %v2015 = vmul.f32 %v1890, 1.442695
      %v2016 = vpow.pop %v2015
      %v2017 = vmul.f32 %v1891, 1.442695
      %v2018 = vpow.pop %v2017
      %v2019 = vmul.f32 %v1892, 1.442695
      %v2020 = vpow.pop %v2019
      %v2021 = vadd.f32 %v1894, 1.0
      %v2022 = vadd.f32 %v1896, 1.0
      %v2023 = vadd.f32 %v1898, 1.0
      %v2024 = vadd.f32 %v1900, 1.0
      %v2025 = vadd.f32 %v1902, 1.0
      %v2026 = vadd.f32 %v1904, 1.0
      %v2027 = vadd.f32 %v1906, 1.0
      %v2028 = vadd.f32 %v1908, 1.0
      %v2029 = vadd.f32 %v1910, 1.0
      %v2030 = vadd.f32 %v1912, 1.0
      %v2031 = vadd.f32 %v1914, 1.0
      %v2032 = vadd.f32 %v1916, 1.0
      %v2033 = vadd.f32 %v1918, 1.0
      %v2034 = vadd.f32 %v1920, 1.0
      %v2035 = vadd.f32 %v1922, 1.0
      %v2036 = vadd.f32 %v1924, 1.0
      %v2037 = vadd.f32 %v1926, 1.0
      %v2038 = vadd.f32 %v1928, 1.0
      %v2039 = vadd.f32 %v1930, 1.0
      %v2040 = vadd.f32 %v1932, 1.0
      %v2041 = vadd.f32 %v1934, 1.0
      %v2042 = vadd.f32 %v1936, 1.0
      %v2043 = vadd.f32 %v1938, 1.0
      %v2044 = vadd.f32 %v1940, 1.0
      %v2045 = vadd.f32 %v1942, 1.0
      %v2046 = vadd.f32 %v1944, 1.0
      %v2047 = vadd.f32 %v1946, 1.0
      %v2048 = vadd.f32 %v1948, 1.0
      %v2049 = vadd.f32 %v1950, 1.0
      %v2050 = vadd.f32 %v1952, 1.0
      %v2051 = vadd.f32 %v1954, 1.0
      %v2052 = vadd.f32 %v1956, 1.0
      %v2053 = vadd.f32 %v1958, 1.0
      %v2054 = vadd.f32 %v1960, 1.0
      %v2055 = vadd.f32 %v1962, 1.0
      %v2056 = vadd.f32 %v1964, 1.0
      %v2057 = vadd.f32 %v1966, 1.0
      %v2058 = vadd.f32 %v1968, 1.0
      %v2059 = vadd.f32 %v1970, 1.0
      %v2060 = vadd.f32 %v1972, 1.0
      %v2061 = vadd.f32 %v1974, 1.0
      %v2062 = vadd.f32 %v1976, 1.0
      %v2063 = vadd.f32 %v1978, 1.0
      %v2064 = vadd.f32 %v1980, 1.0
      %v2065 = vadd.f32 %v1982, 1.0
      %v2066 = vadd.f32 %v1984, 1.0
      %v2067 = vadd.f32 %v1986, 1.0
      %v2068 = vadd.f32 %v1988, 1.0
      %v2069 = vadd.f32 %v1990, 1.0
      %v2070 = vadd.f32 %v1992, 1.0
      %v2071 = vadd.f32 %v1994, 1.0
      %v2072 = vadd.f32 %v1996, 1.0
      %v2073 = vadd.f32 %v1998, 1.0
      %v2074 = vadd.f32 %v2000, 1.0
      %v2075 = vadd.f32 %v2002, 1.0
      %v2076 = vadd.f32 %v2004, 1.0
      %v2077 = vadd.f32 %v2006, 1.0
      %v2078 = vadd.f32 %v2008, 1.0
      %v2079 = vadd.f32 %v2010, 1.0
      %v2080 = vadd.f32 %v2012, 1.0
      %v2081 = vadd.f32 %v2014, 1.0
      %v2082 = vadd.f32 %v2016, 1.0
      %v2083 = vadd.f32 %v2018, 1.0
      %v2084 = vadd.f32 %v2020, 1.0
      %v2085 = vrcp.pop %v2021
      %v2086 = vmul.f32 1.0, %v2085
      %v2087 = vrcp.pop %v2022
      %v2088 = vmul.f32 1.0, %v2087
      %v2089 = vrcp.pop %v2023
      %v2090 = vmul.f32 1.0, %v2089
      %v2091 = vrcp.pop %v2024
      %v2092 = vmul.f32 1.0, %v2091
      %v2093 = vrcp.pop %v2025
      %v2094 = vmul.f32 1.0, %v2093
      %v2095 = vrcp.pop %v2026
      %v2096 = vmul.f32 1.0, %v2095
      %v2097 = vrcp.pop %v2027
      %v2098 = vmul.f32 1.0, %v2097
      %v2099 = vrcp.pop %v2028
      %v2100 = vmul.f32 1.0, %v2099
      %v2101 = vrcp.pop %v2029
      %v2102 = vmul.f32 1.0, %v2101
      %v2103 = vrcp.pop %v2030
      %v2104 = vmul.f32 1.0, %v2103
      %v2105 = vrcp.pop %v2031
      %v2106 = vmul.f32 1.0, %v2105
      %v2107 = vrcp.pop %v2032
      %v2108 = vmul.f32 1.0, %v2107
      %v2109 = vrcp.pop %v2033
      %v2110 = vmul.f32 1.0, %v2109
      %v2111 = vrcp.pop %v2034
      %v2112 = vmul.f32 1.0, %v2111
      %v2113 = vrcp.pop %v2035
      %v2114 = vmul.f32 1.0, %v2113
      %v2115 = vrcp.pop %v2036
      %v2116 = vmul.f32 1.0, %v2115
      %v2117 = vrcp.pop %v2037
      %v2118 = vmul.f32 1.0, %v2117
      %v2119 = vrcp.pop %v2038
      %v2120 = vmul.f32 1.0, %v2119
      %v2121 = vrcp.pop %v2039
      %v2122 = vmul.f32 1.0, %v2121
      %v2123 = vrcp.pop %v2040
      %v2124 = vmul.f32 1.0, %v2123
      %v2125 = vrcp.pop %v2041
      %v2126 = vmul.f32 1.0, %v2125
      %v2127 = vrcp.pop %v2042
      %v2128 = vmul.f32 1.0, %v2127
      %v2129 = vrcp.pop %v2043
      %v2130 = vmul.f32 1.0, %v2129
      %v2131 = vrcp.pop %v2044
      %v2132 = vmul.f32 1.0, %v2131
      %v2133 = vrcp.pop %v2045
      %v2134 = vmul.f32 1.0, %v2133
      %v2135 = vrcp.pop %v2046
      %v2136 = vmul.f32 1.0, %v2135
      %v2137 = vrcp.pop %v2047
      %v2138 = vmul.f32 1.0, %v2137
      %v2139 = vrcp.pop %v2048
      %v2140 = vmul.f32 1.0, %v2139
      %v2141 = vrcp.pop %v2049
      %v2142 = vmul.f32 1.0, %v2141
      %v2143 = vrcp.pop %v2050
      %v2144 = vmul.f32 1.0, %v2143
      %v2145 = vrcp.pop %v2051
      %v2146 = vmul.f32 1.0, %v2145
      %v2147 = vrcp.pop %v2052
      %v2148 = vmul.f32 1.0, %v2147
      %v2149 = vrcp.pop %v2053
      %v2150 = vmul.f32 1.0, %v2149
      %v2151 = vrcp.pop %v2054
      %v2152 = vmul.f32 1.0, %v2151
      %v2153 = vrcp.pop %v2055
      %v2154 = vmul.f32 1.0, %v2153
      %v2155 = vrcp.pop %v2056
      %v2156 = vmul.f32 1.0, %v2155
      %v2157 = vrcp.pop %v2057
      %v2158 = vmul.f32 1.0, %v2157
      %v2159 = vrcp.pop %v2058
      %v2160 = vmul.f32 1.0, %v2159
      %v2161 = vrcp.pop %v2059
      %v2162 = vmul.f32 1.0, %v2161
      %v2163 = vrcp.pop %v2060
      %v2164 = vmul.f32 1.0, %v2163
      %v2165 = vrcp.pop %v2061
      %v2166 = vmul.f32 1.0, %v2165
      %v2167 = vrcp.pop %v2062
      %v2168 = vmul.f32 1.0, %v2167
      %v2169 = vrcp.pop %v2063
      %v2170 = vmul.f32 1.0, %v2169
      %v2171 = vrcp.pop %v2064
      %v2172 = vmul.f32 1.0, %v2171
      %v2173 = vrcp.pop %v2065
      %v2174 = vmul.f32 1.0, %v2173
      %v2175 = vrcp.pop %v2066
      %v2176 = vmul.f32 1.0, %v2175
      %v2177 = vrcp.pop %v2067
      %v2178 = vmul.f32 1.0, %v2177
      %v2179 = vrcp.pop %v2068
      %v2180 = vmul.f32 1.0, %v2179
      %v2181 = vrcp.pop %v2069
      %v2182 = vmul.f32 1.0, %v2181
      %v2183 = vrcp.pop %v2070
      %v2184 = vmul.f32 1.0, %v2183
      %v2185 = vrcp.pop %v2071
      %v2186 = vmul.f32 1.0, %v2185
      %v2187 = vrcp.pop %v2072
      %v2188 = vmul.f32 1.0, %v2187
      %v2189 = vrcp.pop %v2073
      %v2190 = vmul.f32 1.0, %v2189
      %v2191 = vrcp.pop %v2074
      %v2192 = vmul.f32 1.0, %v2191
      %v2193 = vrcp.pop %v2075
      %v2194 = vmul.f32 1.0, %v2193
      %v2195 = vrcp.pop %v2076
      %v2196 = vmul.f32 1.0, %v2195
      %v2197 = vrcp.pop %v2077
      %v2198 = vmul.f32 1.0, %v2197
      %v2199 = vrcp.pop %v2078
      %v2200 = vmul.f32 1.0, %v2199
      %v2201 = vrcp.pop %v2079
      %v2202 = vmul.f32 1.0, %v2201
      %v2203 = vrcp.pop %v2080
      %v2204 = vmul.f32 1.0, %v2203
      %v2205 = vrcp.pop %v2081
      %v2206 = vmul.f32 1.0, %v2205
      %v2207 = vrcp.pop %v2082
      %v2208 = vmul.f32 1.0, %v2207
      %v2209 = vrcp.pop %v2083
      %v2210 = vmul.f32 1.0, %v2209
      %v2211 = vrcp.pop %v2084
      %v2212 = vmul.f32 1.0, %v2211
      %v2213 = vmul.f32 %v1575, %v2086
      %v2214 = vmul.f32 %v1578, %v2088
      %v2215 = vmul.f32 %v1583, %v2090
      %v2216 = vmul.f32 %v1586, %v2092
      %v2217 = vmul.f32 %v1591, %v2094
      %v2218 = vmul.f32 %v1594, %v2096
      %v2219 = vmul.f32 %v1599, %v2098
      %v2220 = vmul.f32 %v1602, %v2100
      %v2221 = vmul.f32 %v1607, %v2102
      %v2222 = vmul.f32 %v1610, %v2104
      %v2223 = vmul.f32 %v1615, %v2106
      %v2224 = vmul.f32 %v1618, %v2108
      %v2225 = vmul.f32 %v1623, %v2110
      %v2226 = vmul.f32 %v1626, %v2112
      %v2227 = vmul.f32 %v1631, %v2114
      %v2228 = vmul.f32 %v1634, %v2116
      %v2229 = vmul.f32 %v1639, %v2118
      %v2230 = vmul.f32 %v1642, %v2120
      %v2231 = vmul.f32 %v1647, %v2122
      %v2232 = vmul.f32 %v1650, %v2124
      %v2233 = vmul.f32 %v1655, %v2126
      %v2234 = vmul.f32 %v1658, %v2128
      %v2235 = vmul.f32 %v1663, %v2130
      %v2236 = vmul.f32 %v1666, %v2132
      %v2237 = vmul.f32 %v1671, %v2134
      %v2238 = vmul.f32 %v1674, %v2136
      %v2239 = vmul.f32 %v1679, %v2138
      %v2240 = vmul.f32 %v1682, %v2140
      %v2241 = vmul.f32 %v1687, %v2142
      %v2242 = vmul.f32 %v1690, %v2144
      %v2243 = vmul.f32 %v1695, %v2146
      %v2244 = vmul.f32 %v1698, %v2148
      %v2245 = vmul.f32 %v1703, %v2150
      %v2246 = vmul.f32 %v1706, %v2152
      %v2247 = vmul.f32 %v1711, %v2154
      %v2248 = vmul.f32 %v1714, %v2156
      %v2249 = vmul.f32 %v1719, %v2158
      %v2250 = vmul.f32 %v1722, %v2160
      %v2251 = vmul.f32 %v1727, %v2162
      %v2252 = vmul.f32 %v1730, %v2164
      %v2253 = vmul.f32 %v1735, %v2166
      %v2254 = vmul.f32 %v1738, %v2168
      %v2255 = vmul.f32 %v1743, %v2170
      %v2256 = vmul.f32 %v1746, %v2172
      %v2257 = vmul.f32 %v1751, %v2174
      %v2258 = vmul.f32 %v1754, %v2176
      %v2259 = vmul.f32 %v1759, %v2178
      %v2260 = vmul.f32 %v1762, %v2180
      %v2261 = vmul.f32 %v1767, %v2182
      %v2262 = vmul.f32 %v1770, %v2184
      %v2263 = vmul.f32 %v1775, %v2186
      %v2264 = vmul.f32 %v1778, %v2188
      %v2265 = vmul.f32 %v1783, %v2190
      %v2266 = vmul.f32 %v1786, %v2192
      %v2267 = vmul.f32 %v1791, %v2194
      %v2268 = vmul.f32 %v1794, %v2196
      %v2269 = vmul.f32 %v1799, %v2198
      %v2270 = vmul.f32 %v1802, %v2200
      %v2271 = vmul.f32 %v1807, %v2202
      %v2272 = vmul.f32 %v1810, %v2204
      %v2273 = vmul.f32 %v1815, %v2206
      %v2274 = vmul.f32 %v1818, %v2208
      %v2275 = vmul.f32 %v1823, %v2210
      %v2276 = vmul.f32 %v1826, %v2212
      %v2277 = vld [vmem:[%s5] sm:$0xff]
      %v2278 = vld [vmem:[%s5 + $0x8] sm:$0xff]
      %v2279 = vpack.c.bf16 %v2214, %v2213
      %v2280 = vpack.c.bf16 %v2216, %v2215
      %v2281 = vpack.c.bf16 %v2218, %v2217
      %v2282 = vpack.c.bf16 %v2220, %v2219
      %v2283 = vpack.c.bf16 %v2222, %v2221
      %v2284 = vpack.c.bf16 %v2224, %v2223
      %v2285 = vpack.c.bf16 %v2226, %v2225
      %v2286 = vpack.c.bf16 %v2228, %v2227
      %v2287 = vpack.c.bf16 %v2230, %v2229
      %v2288 = vpack.c.bf16 %v2232, %v2231
      %v2289 = vpack.c.bf16 %v2234, %v2233
      %v2290 = vpack.c.bf16 %v2236, %v2235
      %v2291 = vpack.c.bf16 %v2238, %v2237
      %v2292 = vpack.c.bf16 %v2240, %v2239
      %v2293 = vpack.c.bf16 %v2242, %v2241
      %v2294 = vpack.c.bf16 %v2244, %v2243
      %v2295 = vpack.c.bf16 %v2246, %v2245
      %v2296 = vpack.c.bf16 %v2248, %v2247
      %v2297 = vpack.c.bf16 %v2250, %v2249
      %v2298 = vpack.c.bf16 %v2252, %v2251
      %v2299 = vpack.c.bf16 %v2254, %v2253
      %v2300 = vpack.c.bf16 %v2256, %v2255
      %v2301 = vpack.c.bf16 %v2258, %v2257
      %v2302 = vpack.c.bf16 %v2260, %v2259
      %v2303 = vpack.c.bf16 %v2262, %v2261
      %v2304 = vpack.c.bf16 %v2264, %v2263
      %v2305 = vpack.c.bf16 %v2266, %v2265
      %v2306 = vpack.c.bf16 %v2268, %v2267
      %v2307 = vpack.c.bf16 %v2270, %v2269
      %v2308 = vpack.c.bf16 %v2272, %v2271
      %v2309 = vpack.c.bf16 %v2274, %v2273
      %v2310 = vpack.c.bf16 %v2276, %v2275
      %v2313 = vunpack.c.l.b16 %v2277
      %v2314 = vunpack.c.h.b16 %v2277
      %v2315 = vunpack.c.l.b16 %v2278
      %v2316 = vunpack.c.h.b16 %v2278
      %v2317 = vpack.c.b16 %v2313, %v2313
      %v2318 = vpack.c.b16 %v2314, %v2314
      %v2319 = vpack.c.b16 %v2315, %v2315
      %v2320 = vpack.c.b16 %v2316, %v2316
      %2325 = vmatprep.subr.bf16.mxu0 0
      %2326 = vmatpush1.bf16.msra.mxu0 %v2286
      %2327 = vmatprep.subr.bf16.mxu0 0
      %2328 = vmatpush1.bf16.msra.mxu0 %v2285
      %2329 = vmatprep.subr.bf16.mxu0 0
      %2330 = vmatpush1.bf16.msra.mxu0 %v2284
      %2331 = vmatprep.subr.bf16.mxu0 0
      %2332 = vmatpush1.bf16.msra.mxu0 %v2283
      %2333 = vmatprep.subr.bf16.mxu0 0
      %2334 = vmatpush1.bf16.msra.mxu0 %v2282
      %2335 = vmatprep.subr.bf16.mxu0 0
      %2336 = vmatpush1.bf16.msra.mxu0 %v2281
      %2337 = vmatprep.subr.bf16.mxu0 0
      %2338 = vmatpush1.bf16.msra.mxu0 %v2280
      %2339 = vmatprep.subr.bf16.mxu0 0
      %2340 = vmatpush1.bf16.msra.mxu0 %v2279
      %2341 = vmatprep.subr.bf16.mxu0 0
      %2342 = vmatpush2.bf16.msra.mxu0 %v2294
      %2343 = vmatprep.subr.bf16.mxu0 0
      %2344 = vmatpush2.bf16.msra.mxu0 %v2293
      %2345 = vmatprep.subr.bf16.mxu0 0
      %2346 = vmatpush2.bf16.msra.mxu0 %v2292
      %2347 = vmatprep.subr.bf16.mxu0 0
      %2348 = vmatpush2.bf16.msra.mxu0 %v2291
      %2349 = vmatprep.subr.bf16.mxu0 0
      %2350 = vmatpush2.bf16.msra.mxu0 %v2290
      %2351 = vmatprep.subr.bf16.mxu0 0
      %2352 = vmatpush2.bf16.msra.mxu0 %v2289
      %2353 = vmatprep.subr.bf16.mxu0 0
      %2354 = vmatpush2.bf16.msra.mxu0 %v2288
      %2355 = vmatprep.subr.bf16.mxu0 0
      %2356 = vmatpush2.bf16.msra.mxu0 %v2287
      %2357 = vmatprep.mubr.bf16.mxu0 %v2318
      %2358 = vmatmul.mubr.bf16.gmra.mxu0 %v2317
      %v2359 = vpop.f32.mrf.mxu0
      %v2360 = vadd.f32 0.0, %v2359
      %v2361 = vpop.f32.mrf.mxu0
      %v2362 = vpop.f32.mrf.mxu0
      %v2363 = vpop.f32.mrf.mxu0
      %2364 = vdwg.mxu0
      %2365 = vmatprep.subr.bf16.mxu0 0
      %2366 = vmatpush1.bf16.msra.mxu0 %v2302
      %2367 = vmatprep.subr.bf16.mxu0 0
      %2368 = vmatpush1.bf16.msra.mxu0 %v2301
      %2369 = vmatprep.subr.bf16.mxu0 0
      %2370 = vmatpush1.bf16.msra.mxu0 %v2300
      %2371 = vmatprep.subr.bf16.mxu0 0
      %2372 = vmatpush1.bf16.msra.mxu0 %v2299
      %2373 = vmatprep.subr.bf16.mxu0 0
      %2374 = vmatpush1.bf16.msra.mxu0 %v2298
      %2375 = vmatprep.subr.bf16.mxu0 0
      %2376 = vmatpush1.bf16.msra.mxu0 %v2297
      %2377 = vmatprep.subr.bf16.mxu0 0
      %2378 = vmatpush1.bf16.msra.mxu0 %v2296
      %2379 = vmatprep.subr.bf16.mxu0 0
      %2380 = vmatpush1.bf16.msra.mxu0 %v2295
      %2381 = vmatprep.subr.bf16.mxu0 0
      %2382 = vmatpush2.bf16.msra.mxu0 %v2310
      %2383 = vmatprep.subr.bf16.mxu0 0
      %2384 = vmatpush2.bf16.msra.mxu0 %v2309
      %2385 = vmatprep.subr.bf16.mxu0 0
      %2386 = vmatpush2.bf16.msra.mxu0 %v2308
      %2387 = vmatprep.subr.bf16.mxu0 0
      %2388 = vmatpush2.bf16.msra.mxu0 %v2307
      %2389 = vmatprep.subr.bf16.mxu0 0
      %2390 = vmatpush2.bf16.msra.mxu0 %v2306
      %2391 = vmatprep.subr.bf16.mxu0 0
      %2392 = vmatpush2.bf16.msra.mxu0 %v2305
      %2393 = vmatprep.subr.bf16.mxu0 0
      %2394 = vmatpush2.bf16.msra.mxu0 %v2304
      %2395 = vmatprep.subr.bf16.mxu0 0
      %2396 = vmatpush2.bf16.msra.mxu0 %v2303
      %2397 = vmatprep.mubr.bf16.mxu0 %v2320
      %2398 = vmatmul.mubr.bf16.gmra.mxu0 %v2319
      %v2399 = vpop.f32.mrf.mxu0
      %v2400 = vadd.f32 %v2360, %v2399
      %v2401 = vpop.f32.mrf.mxu0
      %v2402 = vpop.f32.mrf.mxu0
      %v2403 = vpop.f32.mrf.mxu0
      %2404 = vdwg.mxu0
      %v2405 = vld [vmem:[%s6] sm:$0x1]
      %v2407 = vlaneseq
      %v2408 = vshrl.u32 %v2407, 7
      %v2409 = vsub.s32 0, %v2408
      %v2410 = vrot.slane %v2405, %v2409
      %v2412 = vmul.f32 %v2400, %v2410
      %vm2413 = vcmask 523264
      %v2414 = vsel %vm2413, %v2412, 0.0
      %2415 = vadd.xlane.f32.xlu0 %v2414
      %v2416 = vpop.xlane.xlu0 %2415
      %s2417 = sld [smem:[#allocation2]]
      %v2418 = vstv %s2417
      %v2419 = vadd.f32 %v2416, %v2418
      %v2420 = vxor.u32 %v2419, 2147483648
      %v2421 = vmul.f32 %v2420, 1.442695
      %v2422 = vpow.pop %v2421
      %v2423 = vadd.f32 %v2422, 1.0
      %v2424 = vrcp.pop %v2423
      %v2425 = vmul.f32 1.0, %v2424
      %vm2426 = vcmask 7168
      %2427 = vst.msk [vmem:[%s306] sm:$0xff] %vm2426, %v2425
      %p2428 = scmp.lt.s32.totalorder %s20, 1
      %s2429 = scalar_select %p2428, %s20, 1
      %s2430 = smul.addr %s2429, 8
      %s2431 = scalar_lea.vmem %s8, %s2430
      // Predicated region
      $region53: #{tpu_custom_call.1} parent=51 // pred_check
        %p2432 = pneg %p211
      $region54: #{tpu_custom_call.1} parent=51 // pred_check_branch
        %2434 = sbr.rel (%p2432) target = $region56
      $region55: #{tpu_custom_call.1} parent=51 // pred_region
        _
      $region56: #{tpu_custom_call.1} parent=51 // pred_fallthru
        _
    $region52: #{tpu_custom_call.1} parent=5 // pred_fallthru
      _
    %p2435 = scmp.le.s32.totalorder 2, %s15
    // Predicated region
    $region57: #{tpu_custom_call.1} parent=5 // pred_check
      %p2436 = pneg %p2435
    $region58: #{tpu_custom_call.1} parent=5 // pred_check_branch
      %2438 = sbr.rel (%p2436) target = $region60
    $region59: #{tpu_custom_call.1} parent=5 // pred_region
      %s2439 = ssub.s32 %s15, 2
      // Predicated region
      $region61: #{tpu_custom_call.1} parent=59 // pred_check
        %p2440 = pneg %p217
      $region62: #{tpu_custom_call.1} parent=59 // pred_check_branch
        %2442 = sbr.rel (%p2440) target = $region64
      $region63: #{tpu_custom_call.1} parent=59 // pred_region
        %p2443 = scmp.lt.s32.totalorder %s21, 1
        %s2444 = scalar_select %p2443, %s21, 1
        %s2445 = smul.addr %s2444, 8
        %s2446 = scalar_lea.vmem %s8, %s2445
      $region64: #{tpu_custom_call.1} parent=59 // pred_fallthru
        _
    $region60: #{tpu_custom_call.1} parent=5 // pred_fallthru
      _
  $region6: #{tpu_custom_call.1} parent=0 // loop_footer
    %s19 = sadd.s32 1, %s15
  $region7: #{tpu_custom_call.1} parent=0 // loop_footer_branch
    %14 = sbr.rel target = $region3
  $region8: #{tpu_custom_call.1} parent=0 // loop_exit
    _

</llo_original>
